<compile_context>
chip_gen: v6e
topology: v6e:2x2x1
jax: 0.10.0
libtpu: 0.0.40
codegen_flags: <defaults>
</compile_context>

<pallas_src>
import functools

import jax
import jax.numpy as jnp
from jax.experimental import pallas as pl
from jax.experimental.pallas import tpu as pltpu


def _shift_lanes(x, d):
    """Zero-fill shift along the last axis: out[..., p] = x[..., p + d] (0 if OOB)."""
    if d == 0:
        return x
    n = x.shape[-1]
    zeros = jnp.zeros(x.shape[:-1] + (abs(d),), x.dtype)
    if d > 0:
        return jnp.concatenate([x[..., d:], zeros], axis=-1)
    return jnp.concatenate([zeros, x[..., : n + d]], axis=-1)


def _cbam_kernel(x_ref, w1_ref, w2_ref, colmask_ref, wsa_ref, bsa_ref, o_ref,
                 *, H, W, C, K, Bblk):
    HW = H * W
    P = K // 2

    x = x_ref[...]                                   # (Bblk, C, HW) f32, lane-dense

    # ---------------- Channel attention ----------------
    # Global max / avg pool over the spatial (lane) axis.
    mx = jnp.max(x, axis=2)                          # (Bblk, C)
    av = jnp.sum(x, axis=2) * (1.0 / HW)             # (Bblk, C)

    # Shared SE MLP, run ONCE on the stacked pooled vectors of all images.
    pooled = jnp.concatenate([mx, av], axis=0)       # (2*Bblk, C)
    h = jnp.maximum(
        jnp.dot(pooled, w1_ref[...], preferred_element_type=jnp.float32), 0.0)
    y = jnp.dot(h, w2_ref[...], preferred_element_type=jnp.float32)  # (2*Bblk, C)
    ca = jax.nn.sigmoid(y[:Bblk] + y[Bblk:])         # (Bblk, C)

    out_ca = x * ca[:, :, None]                      # (Bblk, C, HW)

    # ---------------- Spatial attention ----------------
    # Channel max / mean -> two (Bblk, HW) maps, kept in the flat lane layout.
    smax = jnp.max(out_ca, axis=1)                   # (Bblk, HW)
    smean = jnp.sum(out_ca, axis=1) * (1.0 / C)      # (Bblk, HW)
    maps = (smax, smean)                             # conv channel order [max, mean]

    colmask = colmask_ref[...]                       # (K, HW) 0/1 column validity

    # Hoisted kw (column) shifts: shifts[c][kw][b, i*W+j] = map_c[b, i, j+kw-P]
    # (zero where the column index falls outside [0, W)).
    shifts = []
    for c in range(2):
        per_kw = []
        for kw in range(K):
            dw = kw - P
            s = _shift_lanes(maps[c], dw)
            if dw != 0:
                s = s * colmask[kw][None, :]
            per_kw.append(s)
        shifts.append(per_kw)

    # 2*K independent partial accumulators (one per (channel, kh)): pure dense
    # VPU FMAs, no slicing / rotation inside this loop.
    row_acc = []
    for kh in range(K):
        parts = []
        for c in range(2):
            base = c * K * K + kh * K
            p = shifts[c][0] * wsa_ref[base + 0]
            for kw in range(1, K):
                p = p + shifts[c][kw] * wsa_ref[base + kw]
            parts.append(p)
        row_acc.append(parts[0] + parts[1])

    # Row (kh) combination: out[i*W+j] = bias + sum_kh row_acc[kh][(i+kh-P)*W + j].
    # A zero-fill shift by (kh - P) * W lanes zeroes exactly the out-of-range rows.
    acc = jnp.full((Bblk, HW), bsa_ref[0], dtype=jnp.float32)
    for kh in range(K):
        acc = acc + _shift_lanes(row_acc[kh], (kh - P) * W)

    sa = jax.nn.sigmoid(acc)                         # (Bblk, HW)

    # ---------------- Apply + residual ----------------
    o_ref[...] = out_ca * sa[:, None, :] + x


def cbam_forward(x_nchw, w_se1, w_se2, w_sa, b_sa, *, kernel_size=7):
    """x_nchw: (B, C, H, W) f32; w_se1: (Cr, C, 1, 1); w_se2: (C, Cr, 1, 1);
    w_sa: (1, 2, K, K); b_sa: (1,). Returns (B, C, H, W)."""
    B, C, H, W = x_nchw.shape
    Cr = w_se1.shape[0]
    K = kernel_size
    P = K // 2
    HW = H * W

    # Free, contiguous reshape (no transpose): NCHW -> (B, C, H*W), lane-dense.
    x = x_nchw.reshape(B, C, HW).astype(jnp.float32)
    w1_t = jnp.transpose(w_se1.reshape(Cr, C)).astype(jnp.float32)     # (C, Cr)
    w2_t = jnp.transpose(w_se2.reshape(C, Cr)).astype(jnp.float32)     # (Cr, C)
    wsa_flat = w_sa.reshape(-1).astype(jnp.float32)                    # (2*K*K,)
    b_sa = b_sa.reshape(-1).astype(jnp.float32)                        # (1,)

    # Column-validity masks for the flattened kw shifts (tiny, data-independent).
    col = jnp.arange(HW, dtype=jnp.int32) % W
    colmask = jnp.stack(
        [((col + (kw - P) >= 0) & (col + (kw - P) < W)).astype(jnp.float32)
         for kw in range(K)], axis=0)                                  # (K, HW)

    # Batch chunk per grid step: biggest divisor of B whose block stays small
    # enough that double-buffered in+out fits comfortably everywhere (incl. the
    # 64 MiB VMEM of v7x).
    img_bytes = C * HW * 4
    bblk = max(1, min(B, (4 * 1024 * 1024) // max(img_bytes, 1)))
    while B % bblk:
        bblk -= 1

    kernel = functools.partial(_cbam_kernel, H=H, W=W, C=C, K=K, Bblk=bblk)

    out = pl.pallas_call(
        kernel,
        out_shape=jax.ShapeDtypeStruct((B, C, HW), jnp.float32),
        grid=(B // bblk,),
        in_specs=[
            pl.BlockSpec((bblk, C, HW), lambda b: (b, 0, 0)),
            pl.BlockSpec((C, Cr), lambda b: (0, 0)),
            pl.BlockSpec((Cr, C), lambda b: (0, 0)),
            pl.BlockSpec((K, HW), lambda b: (0, 0)),
            pl.BlockSpec(memory_space=pltpu.MemorySpace.SMEM),
            pl.BlockSpec(memory_space=pltpu.MemorySpace.SMEM),
        ],
        out_specs=pl.BlockSpec((bblk, C, HW), lambda b: (b, 0, 0)),
        compiler_params=pltpu.CompilerParams(
            dimension_semantics=("parallel",)),
    )(x, w1_t, w2_t, colmask, wsa_flat, b_sa)

    return out.reshape(B, C, H, W)                                     # free reshape


def cbam_reference(x_nchw, w_se1, w_se2, w_sa, b_sa):
    """Pure-JAX reference mirroring the PyTorch forward, for verification."""
    B, C, H, W = x_nchw.shape
    Cr = w_se1.shape[0]
    W1 = w_se1.reshape(Cr, C)
    W2 = w_se2.reshape(C, Cr)

    mx = jnp.max(x_nchw, axis=(2, 3))                                  # (B, C)
    av = jnp.mean(x_nchw, axis=(2, 3))

    def se(v):
        return jnp.maximum(v @ W1.T, 0.0) @ W2.T

    ca = jax.nn.sigmoid(se(mx) + se(av))[:, :, None, None]             # (B, C, 1, 1)
    out = x_nchw * ca

    smax = jnp.max(out, axis=1, keepdims=True)
    smean = jnp.mean(out, axis=1, keepdims=True)
    inp = jnp.concatenate([smax, smean], axis=1)                       # (B, 2, H, W)
    conv = jax.lax.conv_general_dilated(
        inp, w_sa, window_strides=(1, 1), padding=[(3, 3), (3, 3)],
        dimension_numbers=("NCHW", "OIHW", "NCHW"))
    sa = jax.nn.sigmoid(conv + b_sa.reshape(1, 1, 1, 1))
    return out * sa + x_nchw


if __name__ == "__main__":
    # Small config consistent with the module: channel=32, reduction=4, ks=7.
    B, C, H, W = 2, 32, 16, 16
    reduction = 4
    Cr = C // reduction
    K = 7

    key = jax.random.PRNGKey(0)
    kx, k1, k2, k3, k4 = jax.random.split(key, 5)

    x = jax.random.normal(kx, (B, C, H, W), dtype=jnp.float32)
    # Deterministic kaiming-normal-ish init (fan_out scaling), no checkpoint load.
    w_se1 = jax.random.normal(k1, (Cr, C, 1, 1), jnp.float32) * (2.0 / Cr) ** 0.5
    w_se2 = jax.random.normal(k2, (C, Cr, 1, 1), jnp.float32) * (2.0 / C) ** 0.5
    w_sa = jax.random.normal(k3, (1, 2, K, K), jnp.float32) * (2.0 / (K * K)) ** 0.5
    b_sa = jnp.zeros((1,), jnp.float32)

    out = cbam_forward(x, w_se1, w_se2, w_sa, b_sa, kernel_size=K)
    out = jax.block_until_ready(out)

    ref = cbam_reference(x, w_se1, w_se2, w_sa, b_sa)
    assert out.shape == (B, C, H, W)
    assert jnp.allclose(out, ref, rtol=1e-4, atol=1e-4), (
        f"max abs err {jnp.max(jnp.abs(out - ref))}")

    print("KERNEL_OK")
</pallas_src>

<mosaic_0001>
module attributes {stable_mosaic.version = 11 : i64} {
  func.func @_cbam_kernel(%arg0: i32, %arg1: memref<2x32x256xf32, #tpu.memory_space<vmem>>, %arg2: memref<32x8xf32, #tpu.memory_space<vmem>>, %arg3: memref<8x32xf32, #tpu.memory_space<vmem>>, %arg4: memref<7x256xf32, #tpu.memory_space<vmem>>, %arg5: memref<98xf32, #tpu.memory_space<smem>>, %arg6: memref<1xf32, #tpu.memory_space<smem>>, %arg7: memref<2x32x256xf32, #tpu.memory_space<vmem>>) attributes {dimension_semantics = [#tpu.dimension_semantics<parallel>], iteration_bounds = array<i64: 1>, scalar_prefetch = 0 : i64, scratch_operands = 0 : i64, tpu.core_type = #tpu.core_type<tc>, window_params = [{transform_indices = @transform_0, window_bounds = array<i64: 2, 32, 256>}, {pipeline_mode = #tpu.pipeline_mode<synchronous>, transform_indices = @transform_1, window_bounds = array<i64: 32, 8>}, {pipeline_mode = #tpu.pipeline_mode<synchronous>, transform_indices = @transform_2, window_bounds = array<i64: 8, 32>}, {pipeline_mode = #tpu.pipeline_mode<synchronous>, transform_indices = @transform_3, window_bounds = array<i64: 7, 256>}, {transform_indices = @transform_4, window_bounds = array<i64: 98>}, {transform_indices = @transform_5, window_bounds = array<i64: 1>}, {transform_indices = @transform_6, window_bounds = array<i64: 2, 32, 256>}]} {
    %c0 = arith.constant 0 : index
    %c0_0 = arith.constant 0 : index
    %c0_1 = arith.constant 0 : index
    %0 = vector.load %arg1[%c0, %c0_0, %c0_1] : memref<2x32x256xf32, #tpu.memory_space<vmem>>, vector<2x32x256xf32>
    %cst = arith.constant dense<0xFF800000> : vector<2x32xf32>
    %1 = vector.multi_reduction <maximumf>, %0, %cst [2] : vector<2x32x256xf32> to vector<2x32xf32>
    %cst_2 = arith.constant dense<0.000000e+00> : vector<2x32xf32>
    %2 = vector.multi_reduction <add>, %0, %cst_2 [2] : vector<2x32x256xf32> to vector<2x32xf32>
    %cst_3 = arith.constant 3.906250e-03 : f32
    %3 = vector.broadcast %cst_3 : f32 to vector<2x32xf32>
    %4 = arith.mulf %2, %3 : vector<2x32xf32>
    %5 = tpu.concatenate %1, %4 in 0 : vector<2x32xf32>, vector<2x32xf32> -> vector<4x32xf32>
    %c0_4 = arith.constant 0 : index
    %c0_5 = arith.constant 0 : index
    %6 = vector.load %arg2[%c0_4, %c0_5] : memref<32x8xf32, #tpu.memory_space<vmem>>, vector<32x8xf32>
    %cst_6 = arith.constant dense<0.000000e+00> : vector<4x8xf32>
    %7 = tpu.matmul %5, %6, %cst_6 {dimension_numbers = #tpu.dot_dimension_numbers<[1], [0], [0], [1], [0, 0, 1, 1], [], []>} : vector<4x32xf32>, vector<32x8xf32>, vector<4x8xf32> -> vector<4x8xf32>
    %cst_7 = arith.constant 0.000000e+00 : f32
    %8 = vector.broadcast %cst_7 : f32 to vector<4x8xf32>
    %9 = arith.maximumf %7, %8 : vector<4x8xf32>
    %c0_8 = arith.constant 0 : index
    %c0_9 = arith.constant 0 : index
    %10 = vector.load %arg3[%c0_8, %c0_9] : memref<8x32xf32, #tpu.memory_space<vmem>>, vector<8x32xf32>
    %cst_10 = arith.constant dense<0.000000e+00> : vector<4x32xf32>
    %11 = tpu.matmul %9, %10, %cst_10 {dimension_numbers = #tpu.dot_dimension_numbers<[1], [0], [0], [1], [0, 0, 1, 1], [], []>} : vector<4x8xf32>, vector<8x32xf32>, vector<4x32xf32> -> vector<4x32xf32>
    %12 = vector.extract_strided_slice %11 {offsets = [0, 0], sizes = [2, 32], strides = [1, 1]} : vector<4x32xf32> to vector<2x32xf32>
    %13 = vector.extract_strided_slice %11 {offsets = [2, 0], sizes = [2, 32], strides = [1, 1]} : vector<4x32xf32> to vector<2x32xf32>
    %14 = arith.addf %12, %13 : vector<2x32xf32>
    %15 = arith.negf %14 : vector<2x32xf32>
    %16 = math.exp %15 : vector<2x32xf32>
    %cst_11 = arith.constant 1.000000e+00 : f32
    %17 = vector.broadcast %cst_11 : f32 to vector<2x32xf32>
    %18 = arith.addf %17, %16 : vector<2x32xf32>
    %19 = arith.divf %17, %18 : vector<2x32xf32>
    %20 = vector.shape_cast %19 : vector<2x32xf32> to vector<2x32x1xf32>
    %21 = vector.broadcast %20 : vector<2x32x1xf32> to vector<2x32x256xf32>
    %22 = arith.mulf %0, %21 : vector<2x32x256xf32>
    %cst_12 = arith.constant dense<0xFF800000> : vector<2x256xf32>
    %23 = vector.multi_reduction <maximumf>, %22, %cst_12 [1] : vector<2x32x256xf32> to vector<2x256xf32>
    %cst_13 = arith.constant dense<0.000000e+00> : vector<2x256xf32>
    %24 = vector.multi_reduction <add>, %22, %cst_13 [1] : vector<2x32x256xf32> to vector<2x256xf32>
    %cst_14 = arith.constant 3.125000e-02 : f32
    %25 = vector.broadcast %cst_14 : f32 to vector<2x256xf32>
    %26 = arith.mulf %24, %25 : vector<2x256xf32>
    %c0_15 = arith.constant 0 : index
    %c0_16 = arith.constant 0 : index
    %27 = vector.load %arg4[%c0_15, %c0_16] : memref<7x256xf32, #tpu.memory_space<vmem>>, vector<7x256xf32>
    %cst_17 = arith.constant 0.000000e+00 : f32
    %28 = vector.broadcast %cst_17 : f32 to vector<2x3xf32>
    %29 = vector.extract_strided_slice %23 {offsets = [0, 0], sizes = [2, 253], strides = [1, 1]} : vector<2x256xf32> to vector<2x253xf32>
    %30 = tpu.concatenate %28, %29 in 1 : vector<2x3xf32>, vector<2x253xf32> -> vector<2x256xf32>
    %31 = vector.extract_strided_slice %27 {offsets = [0, 0], sizes = [1, 256], strides = [1, 1]} : vector<7x256xf32> to vector<1x256xf32>
    %32 = vector.shape_cast %31 : vector<1x256xf32> to vector<256xf32>
    %33 = vector.shape_cast %32 : vector<256xf32> to vector<1x256xf32>
    %34 = vector.broadcast %33 : vector<1x256xf32> to vector<2x256xf32>
    %35 = arith.mulf %30, %34 : vector<2x256xf32>
    %cst_18 = arith.constant 0.000000e+00 : f32
    %36 = vector.broadcast %cst_18 : f32 to vector<2x2xf32>
    %37 = vector.extract_strided_slice %23 {offsets = [0, 0], sizes = [2, 254], strides = [1, 1]} : vector<2x256xf32> to vector<2x254xf32>
    %38 = tpu.concatenate %36, %37 in 1 : vector<2x2xf32>, vector<2x254xf32> -> vector<2x256xf32>
    %39 = vector.extract_strided_slice %27 {offsets = [1, 0], sizes = [1, 256], strides = [1, 1]} : vector<7x256xf32> to vector<1x256xf32>
    %40 = vector.shape_cast %39 : vector<1x256xf32> to vector<256xf32>
    %41 = vector.shape_cast %40 : vector<256xf32> to vector<1x256xf32>
    %42 = vector.broadcast %41 : vector<1x256xf32> to vector<2x256xf32>
    %43 = arith.mulf %38, %42 : vector<2x256xf32>
    %cst_19 = arith.constant 0.000000e+00 : f32
    %44 = vector.broadcast %cst_19 : f32 to vector<2x1xf32>
    %45 = vector.extract_strided_slice %23 {offsets = [0, 0], sizes = [2, 255], strides = [1, 1]} : vector<2x256xf32> to vector<2x255xf32>
    %46 = tpu.concatenate %44, %45 in 1 : vector<2x1xf32>, vector<2x255xf32> -> vector<2x256xf32>
    %47 = vector.extract_strided_slice %27 {offsets = [2, 0], sizes = [1, 256], strides = [1, 1]} : vector<7x256xf32> to vector<1x256xf32>
    %48 = vector.shape_cast %47 : vector<1x256xf32> to vector<256xf32>
    %49 = vector.shape_cast %48 : vector<256xf32> to vector<1x256xf32>
    %50 = vector.broadcast %49 : vector<1x256xf32> to vector<2x256xf32>
    %51 = arith.mulf %46, %50 : vector<2x256xf32>
    %cst_20 = arith.constant 0.000000e+00 : f32
    %52 = vector.broadcast %cst_20 : f32 to vector<2x1xf32>
    %53 = vector.extract_strided_slice %23 {offsets = [0, 1], sizes = [2, 255], strides = [1, 1]} : vector<2x256xf32> to vector<2x255xf32>
    %54 = tpu.concatenate %53, %52 in 1 : vector<2x255xf32>, vector<2x1xf32> -> vector<2x256xf32>
    %55 = vector.extract_strided_slice %27 {offsets = [4, 0], sizes = [1, 256], strides = [1, 1]} : vector<7x256xf32> to vector<1x256xf32>
    %56 = vector.shape_cast %55 : vector<1x256xf32> to vector<256xf32>
    %57 = vector.shape_cast %56 : vector<256xf32> to vector<1x256xf32>
    %58 = vector.broadcast %57 : vector<1x256xf32> to vector<2x256xf32>
    %59 = arith.mulf %54, %58 : vector<2x256xf32>
    %cst_21 = arith.constant 0.000000e+00 : f32
    %60 = vector.broadcast %cst_21 : f32 to vector<2x2xf32>
    %61 = vector.extract_strided_slice %23 {offsets = [0, 2], sizes = [2, 254], strides = [1, 1]} : vector<2x256xf32> to vector<2x254xf32>
    %62 = tpu.concatenate %61, %60 in 1 : vector<2x254xf32>, vector<2x2xf32> -> vector<2x256xf32>
    %63 = vector.extract_strided_slice %27 {offsets = [5, 0], sizes = [1, 256], strides = [1, 1]} : vector<7x256xf32> to vector<1x256xf32>
    %64 = vector.shape_cast %63 : vector<1x256xf32> to vector<256xf32>
    %65 = vector.shape_cast %64 : vector<256xf32> to vector<1x256xf32>
    %66 = vector.broadcast %65 : vector<1x256xf32> to vector<2x256xf32>
    %67 = arith.mulf %62, %66 : vector<2x256xf32>
    %cst_22 = arith.constant 0.000000e+00 : f32
    %68 = vector.broadcast %cst_22 : f32 to vector<2x3xf32>
    %69 = vector.extract_strided_slice %23 {offsets = [0, 3], sizes = [2, 253], strides = [1, 1]} : vector<2x256xf32> to vector<2x253xf32>
    %70 = tpu.concatenate %69, %68 in 1 : vector<2x253xf32>, vector<2x3xf32> -> vector<2x256xf32>
    %71 = vector.extract_strided_slice %27 {offsets = [6, 0], sizes = [1, 256], strides = [1, 1]} : vector<7x256xf32> to vector<1x256xf32>
    %72 = vector.shape_cast %71 : vector<1x256xf32> to vector<256xf32>
    %73 = vector.shape_cast %72 : vector<256xf32> to vector<1x256xf32>
    %74 = vector.broadcast %73 : vector<1x256xf32> to vector<2x256xf32>
    %75 = arith.mulf %70, %74 : vector<2x256xf32>
    %cst_23 = arith.constant 0.000000e+00 : f32
    %76 = vector.broadcast %cst_23 : f32 to vector<2x3xf32>
    %77 = vector.extract_strided_slice %26 {offsets = [0, 0], sizes = [2, 253], strides = [1, 1]} : vector<2x256xf32> to vector<2x253xf32>
    %78 = tpu.concatenate %76, %77 in 1 : vector<2x3xf32>, vector<2x253xf32> -> vector<2x256xf32>
    %79 = vector.extract_strided_slice %27 {offsets = [0, 0], sizes = [1, 256], strides = [1, 1]} : vector<7x256xf32> to vector<1x256xf32>
    %80 = vector.shape_cast %79 : vector<1x256xf32> to vector<256xf32>
    %81 = vector.shape_cast %80 : vector<256xf32> to vector<1x256xf32>
    %82 = vector.broadcast %81 : vector<1x256xf32> to vector<2x256xf32>
    %83 = arith.mulf %78, %82 : vector<2x256xf32>
    %cst_24 = arith.constant 0.000000e+00 : f32
    %84 = vector.broadcast %cst_24 : f32 to vector<2x2xf32>
    %85 = vector.extract_strided_slice %26 {offsets = [0, 0], sizes = [2, 254], strides = [1, 1]} : vector<2x256xf32> to vector<2x254xf32>
    %86 = tpu.concatenate %84, %85 in 1 : vector<2x2xf32>, vector<2x254xf32> -> vector<2x256xf32>
    %87 = vector.extract_strided_slice %27 {offsets = [1, 0], sizes = [1, 256], strides = [1, 1]} : vector<7x256xf32> to vector<1x256xf32>
    %88 = vector.shape_cast %87 : vector<1x256xf32> to vector<256xf32>
    %89 = vector.shape_cast %88 : vector<256xf32> to vector<1x256xf32>
    %90 = vector.broadcast %89 : vector<1x256xf32> to vector<2x256xf32>
    %91 = arith.mulf %86, %90 : vector<2x256xf32>
    %cst_25 = arith.constant 0.000000e+00 : f32
    %92 = vector.broadcast %cst_25 : f32 to vector<2x1xf32>
    %93 = vector.extract_strided_slice %26 {offsets = [0, 0], sizes = [2, 255], strides = [1, 1]} : vector<2x256xf32> to vector<2x255xf32>
    %94 = tpu.concatenate %92, %93 in 1 : vector<2x1xf32>, vector<2x255xf32> -> vector<2x256xf32>
    %95 = vector.extract_strided_slice %27 {offsets = [2, 0], sizes = [1, 256], strides = [1, 1]} : vector<7x256xf32> to vector<1x256xf32>
    %96 = vector.shape_cast %95 : vector<1x256xf32> to vector<256xf32>
    %97 = vector.shape_cast %96 : vector<256xf32> to vector<1x256xf32>
    %98 = vector.broadcast %97 : vector<1x256xf32> to vector<2x256xf32>
    %99 = arith.mulf %94, %98 : vector<2x256xf32>
    %cst_26 = arith.constant 0.000000e+00 : f32
    %100 = vector.broadcast %cst_26 : f32 to vector<2x1xf32>
    %101 = vector.extract_strided_slice %26 {offsets = [0, 1], sizes = [2, 255], strides = [1, 1]} : vector<2x256xf32> to vector<2x255xf32>
    %102 = tpu.concatenate %101, %100 in 1 : vector<2x255xf32>, vector<2x1xf32> -> vector<2x256xf32>
    %103 = vector.extract_strided_slice %27 {offsets = [4, 0], sizes = [1, 256], strides = [1, 1]} : vector<7x256xf32> to vector<1x256xf32>
    %104 = vector.shape_cast %103 : vector<1x256xf32> to vector<256xf32>
    %105 = vector.shape_cast %104 : vector<256xf32> to vector<1x256xf32>
    %106 = vector.broadcast %105 : vector<1x256xf32> to vector<2x256xf32>
    %107 = arith.mulf %102, %106 : vector<2x256xf32>
    %cst_27 = arith.constant 0.000000e+00 : f32
    %108 = vector.broadcast %cst_27 : f32 to vector<2x2xf32>
    %109 = vector.extract_strided_slice %26 {offsets = [0, 2], sizes = [2, 254], strides = [1, 1]} : vector<2x256xf32> to vector<2x254xf32>
    %110 = tpu.concatenate %109, %108 in 1 : vector<2x254xf32>, vector<2x2xf32> -> vector<2x256xf32>
    %111 = vector.extract_strided_slice %27 {offsets = [5, 0], sizes = [1, 256], strides = [1, 1]} : vector<7x256xf32> to vector<1x256xf32>
    %112 = vector.shape_cast %111 : vector<1x256xf32> to vector<256xf32>
    %113 = vector.shape_cast %112 : vector<256xf32> to vector<1x256xf32>
    %114 = vector.broadcast %113 : vector<1x256xf32> to vector<2x256xf32>
    %115 = arith.mulf %110, %114 : vector<2x256xf32>
    %cst_28 = arith.constant 0.000000e+00 : f32
    %116 = vector.broadcast %cst_28 : f32 to vector<2x3xf32>
    %117 = vector.extract_strided_slice %26 {offsets = [0, 3], sizes = [2, 253], strides = [1, 1]} : vector<2x256xf32> to vector<2x253xf32>
    %118 = tpu.concatenate %117, %116 in 1 : vector<2x253xf32>, vector<2x3xf32> -> vector<2x256xf32>
    %119 = vector.extract_strided_slice %27 {offsets = [6, 0], sizes = [1, 256], strides = [1, 1]} : vector<7x256xf32> to vector<1x256xf32>
    %120 = vector.shape_cast %119 : vector<1x256xf32> to vector<256xf32>
    %121 = vector.shape_cast %120 : vector<256xf32> to vector<1x256xf32>
    %122 = vector.broadcast %121 : vector<1x256xf32> to vector<2x256xf32>
    %123 = arith.mulf %118, %122 : vector<2x256xf32>
    %c0_29 = arith.constant 0 : index
    %124 = memref.load %arg5[%c0_29] : memref<98xf32, #tpu.memory_space<smem>>
    %125 = vector.broadcast %124 : f32 to vector<2x256xf32>
    %126 = arith.mulf %35, %125 : vector<2x256xf32>
    %c1 = arith.constant 1 : index
    %127 = memref.load %arg5[%c1] : memref<98xf32, #tpu.memory_space<smem>>
    %128 = vector.broadcast %127 : f32 to vector<2x256xf32>
    %129 = arith.mulf %43, %128 : vector<2x256xf32>
    %130 = arith.addf %126, %129 : vector<2x256xf32>
    %c2 = arith.constant 2 : index
    %131 = memref.load %arg5[%c2] : memref<98xf32, #tpu.memory_space<smem>>
    %132 = vector.broadcast %131 : f32 to vector<2x256xf32>
    %133 = arith.mulf %51, %132 : vector<2x256xf32>
    %134 = arith.addf %130, %133 : vector<2x256xf32>
    %c3 = arith.constant 3 : index
    %135 = memref.load %arg5[%c3] : memref<98xf32, #tpu.memory_space<smem>>
    %136 = vector.broadcast %135 : f32 to vector<2x256xf32>
    %137 = arith.mulf %23, %136 : vector<2x256xf32>
    %138 = arith.addf %134, %137 : vector<2x256xf32>
    %c4 = arith.constant 4 : index
    %139 = memref.load %arg5[%c4] : memref<98xf32, #tpu.memory_space<smem>>
    %140 = vector.broadcast %139 : f32 to vector<2x256xf32>
    %141 = arith.mulf %59, %140 : vector<2x256xf32>
    %142 = arith.addf %138, %141 : vector<2x256xf32>
    %c5 = arith.constant 5 : index
    %143 = memref.load %arg5[%c5] : memref<98xf32, #tpu.memory_space<smem>>
    %144 = vector.broadcast %143 : f32 to vector<2x256xf32>
    %145 = arith.mulf %67, %144 : vector<2x256xf32>
    %146 = arith.addf %142, %145 : vector<2x256xf32>
    %c6 = arith.constant 6 : index
    %147 = memref.load %arg5[%c6] : memref<98xf32, #tpu.memory_space<smem>>
    %148 = vector.broadcast %147 : f32 to vector<2x256xf32>
    %149 = arith.mulf %75, %148 : vector<2x256xf32>
    %150 = arith.addf %146, %149 : vector<2x256xf32>
    %c49 = arith.constant 49 : index
    %151 = memref.load %arg5[%c49] : memref<98xf32, #tpu.memory_space<smem>>
    %152 = vector.broadcast %151 : f32 to vector<2x256xf32>
    %153 = arith.mulf %83, %152 : vector<2x256xf32>
    %c50 = arith.constant 50 : index
    %154 = memref.load %arg5[%c50] : memref<98xf32, #tpu.memory_space<smem>>
    %155 = vector.broadcast %154 : f32 to vector<2x256xf32>
    %156 = arith.mulf %91, %155 : vector<2x256xf32>
    %157 = arith.addf %153, %156 : vector<2x256xf32>
    %c51 = arith.constant 51 : index
    %158 = memref.load %arg5[%c51] : memref<98xf32, #tpu.memory_space<smem>>
    %159 = vector.broadcast %158 : f32 to vector<2x256xf32>
    %160 = arith.mulf %99, %159 : vector<2x256xf32>
    %161 = arith.addf %157, %160 : vector<2x256xf32>
    %c52 = arith.constant 52 : index
    %162 = memref.load %arg5[%c52] : memref<98xf32, #tpu.memory_space<smem>>
    %163 = vector.broadcast %162 : f32 to vector<2x256xf32>
    %164 = arith.mulf %26, %163 : vector<2x256xf32>
    %165 = arith.addf %161, %164 : vector<2x256xf32>
    %c53 = arith.constant 53 : index
    %166 = memref.load %arg5[%c53] : memref<98xf32, #tpu.memory_space<smem>>
    %167 = vector.broadcast %166 : f32 to vector<2x256xf32>
    %168 = arith.mulf %107, %167 : vector<2x256xf32>
    %169 = arith.addf %165, %168 : vector<2x256xf32>
    %c54 = arith.constant 54 : index
    %170 = memref.load %arg5[%c54] : memref<98xf32, #tpu.memory_space<smem>>
    %171 = vector.broadcast %170 : f32 to vector<2x256xf32>
    %172 = arith.mulf %115, %171 : vector<2x256xf32>
    %173 = arith.addf %169, %172 : vector<2x256xf32>
    %c55 = arith.constant 55 : index
    %174 = memref.load %arg5[%c55] : memref<98xf32, #tpu.memory_space<smem>>
    %175 = vector.broadcast %174 : f32 to vector<2x256xf32>
    %176 = arith.mulf %123, %175 : vector<2x256xf32>
    %177 = arith.addf %173, %176 : vector<2x256xf32>
    %178 = arith.addf %150, %177 : vector<2x256xf32>
    %c7 = arith.constant 7 : index
    %179 = memref.load %arg5[%c7] : memref<98xf32, #tpu.memory_space<smem>>
    %180 = vector.broadcast %179 : f32 to vector<2x256xf32>
    %181 = arith.mulf %35, %180 : vector<2x256xf32>
    %c8 = arith.constant 8 : index
    %182 = memref.load %arg5[%c8] : memref<98xf32, #tpu.memory_space<smem>>
    %183 = vector.broadcast %182 : f32 to vector<2x256xf32>
    %184 = arith.mulf %43, %183 : vector<2x256xf32>
    %185 = arith.addf %181, %184 : vector<2x256xf32>
    %c9 = arith.constant 9 : index
    %186 = memref.load %arg5[%c9] : memref<98xf32, #tpu.memory_space<smem>>
    %187 = vector.broadcast %186 : f32 to vector<2x256xf32>
    %188 = arith.mulf %51, %187 : vector<2x256xf32>
    %189 = arith.addf %185, %188 : vector<2x256xf32>
    %c10 = arith.constant 10 : index
    %190 = memref.load %arg5[%c10] : memref<98xf32, #tpu.memory_space<smem>>
    %191 = vector.broadcast %190 : f32 to vector<2x256xf32>
    %192 = arith.mulf %23, %191 : vector<2x256xf32>
    %193 = arith.addf %189, %192 : vector<2x256xf32>
    %c11 = arith.constant 11 : index
    %194 = memref.load %arg5[%c11] : memref<98xf32, #tpu.memory_space<smem>>
    %195 = vector.broadcast %194 : f32 to vector<2x256xf32>
    %196 = arith.mulf %59, %195 : vector<2x256xf32>
    %197 = arith.addf %193, %196 : vector<2x256xf32>
    %c12 = arith.constant 12 : index
    %198 = memref.load %arg5[%c12] : memref<98xf32, #tpu.memory_space<smem>>
    %199 = vector.broadcast %198 : f32 to vector<2x256xf32>
    %200 = arith.mulf %67, %199 : vector<2x256xf32>
    %201 = arith.addf %197, %200 : vector<2x256xf32>
    %c13 = arith.constant 13 : index
    %202 = memref.load %arg5[%c13] : memref<98xf32, #tpu.memory_space<smem>>
    %203 = vector.broadcast %202 : f32 to vector<2x256xf32>
    %204 = arith.mulf %75, %203 : vector<2x256xf32>
    %205 = arith.addf %201, %204 : vector<2x256xf32>
    %c56 = arith.constant 56 : index
    %206 = memref.load %arg5[%c56] : memref<98xf32, #tpu.memory_space<smem>>
    %207 = vector.broadcast %206 : f32 to vector<2x256xf32>
    %208 = arith.mulf %83, %207 : vector<2x256xf32>
    %c57 = arith.constant 57 : index
    %209 = memref.load %arg5[%c57] : memref<98xf32, #tpu.memory_space<smem>>
    %210 = vector.broadcast %209 : f32 to vector<2x256xf32>
    %211 = arith.mulf %91, %210 : vector<2x256xf32>
    %212 = arith.addf %208, %211 : vector<2x256xf32>
    %c58 = arith.constant 58 : index
    %213 = memref.load %arg5[%c58] : memref<98xf32, #tpu.memory_space<smem>>
    %214 = vector.broadcast %213 : f32 to vector<2x256xf32>
    %215 = arith.mulf %99, %214 : vector<2x256xf32>
    %216 = arith.addf %212, %215 : vector<2x256xf32>
    %c59 = arith.constant 59 : index
    %217 = memref.load %arg5[%c59] : memref<98xf32, #tpu.memory_space<smem>>
    %218 = vector.broadcast %217 : f32 to vector<2x256xf32>
    %219 = arith.mulf %26, %218 : vector<2x256xf32>
    %220 = arith.addf %216, %219 : vector<2x256xf32>
    %c60 = arith.constant 60 : index
    %221 = memref.load %arg5[%c60] : memref<98xf32, #tpu.memory_space<smem>>
    %222 = vector.broadcast %221 : f32 to vector<2x256xf32>
    %223 = arith.mulf %107, %222 : vector<2x256xf32>
    %224 = arith.addf %220, %223 : vector<2x256xf32>
    %c61 = arith.constant 61 : index
    %225 = memref.load %arg5[%c61] : memref<98xf32, #tpu.memory_space<smem>>
    %226 = vector.broadcast %225 : f32 to vector<2x256xf32>
    %227 = arith.mulf %115, %226 : vector<2x256xf32>
    %228 = arith.addf %224, %227 : vector<2x256xf32>
    %c62 = arith.constant 62 : index
    %229 = memref.load %arg5[%c62] : memref<98xf32, #tpu.memory_space<smem>>
    %230 = vector.broadcast %229 : f32 to vector<2x256xf32>
    %231 = arith.mulf %123, %230 : vector<2x256xf32>
    %232 = arith.addf %228, %231 : vector<2x256xf32>
    %233 = arith.addf %205, %232 : vector<2x256xf32>
    %c14 = arith.constant 14 : index
    %234 = memref.load %arg5[%c14] : memref<98xf32, #tpu.memory_space<smem>>
    %235 = vector.broadcast %234 : f32 to vector<2x256xf32>
    %236 = arith.mulf %35, %235 : vector<2x256xf32>
    %c15 = arith.constant 15 : index
    %237 = memref.load %arg5[%c15] : memref<98xf32, #tpu.memory_space<smem>>
    %238 = vector.broadcast %237 : f32 to vector<2x256xf32>
    %239 = arith.mulf %43, %238 : vector<2x256xf32>
    %240 = arith.addf %236, %239 : vector<2x256xf32>
    %c16 = arith.constant 16 : index
    %241 = memref.load %arg5[%c16] : memref<98xf32, #tpu.memory_space<smem>>
    %242 = vector.broadcast %241 : f32 to vector<2x256xf32>
    %243 = arith.mulf %51, %242 : vector<2x256xf32>
    %244 = arith.addf %240, %243 : vector<2x256xf32>
    %c17 = arith.constant 17 : index
    %245 = memref.load %arg5[%c17] : memref<98xf32, #tpu.memory_space<smem>>
    %246 = vector.broadcast %245 : f32 to vector<2x256xf32>
    %247 = arith.mulf %23, %246 : vector<2x256xf32>
    %248 = arith.addf %244, %247 : vector<2x256xf32>
    %c18 = arith.constant 18 : index
    %249 = memref.load %arg5[%c18] : memref<98xf32, #tpu.memory_space<smem>>
    %250 = vector.broadcast %249 : f32 to vector<2x256xf32>
    %251 = arith.mulf %59, %250 : vector<2x256xf32>
    %252 = arith.addf %248, %251 : vector<2x256xf32>
    %c19 = arith.constant 19 : index
    %253 = memref.load %arg5[%c19] : memref<98xf32, #tpu.memory_space<smem>>
    %254 = vector.broadcast %253 : f32 to vector<2x256xf32>
    %255 = arith.mulf %67, %254 : vector<2x256xf32>
    %256 = arith.addf %252, %255 : vector<2x256xf32>
    %c20 = arith.constant 20 : index
    %257 = memref.load %arg5[%c20] : memref<98xf32, #tpu.memory_space<smem>>
    %258 = vector.broadcast %257 : f32 to vector<2x256xf32>
    %259 = arith.mulf %75, %258 : vector<2x256xf32>
    %260 = arith.addf %256, %259 : vector<2x256xf32>
    %c63 = arith.constant 63 : index
    %261 = memref.load %arg5[%c63] : memref<98xf32, #tpu.memory_space<smem>>
    %262 = vector.broadcast %261 : f32 to vector<2x256xf32>
    %263 = arith.mulf %83, %262 : vector<2x256xf32>
    %c64 = arith.constant 64 : index
    %264 = memref.load %arg5[%c64] : memref<98xf32, #tpu.memory_space<smem>>
    %265 = vector.broadcast %264 : f32 to vector<2x256xf32>
    %266 = arith.mulf %91, %265 : vector<2x256xf32>
    %267 = arith.addf %263, %266 : vector<2x256xf32>
    %c65 = arith.constant 65 : index
    %268 = memref.load %arg5[%c65] : memref<98xf32, #tpu.memory_space<smem>>
    %269 = vector.broadcast %268 : f32 to vector<2x256xf32>
    %270 = arith.mulf %99, %269 : vector<2x256xf32>
    %271 = arith.addf %267, %270 : vector<2x256xf32>
    %c66 = arith.constant 66 : index
    %272 = memref.load %arg5[%c66] : memref<98xf32, #tpu.memory_space<smem>>
    %273 = vector.broadcast %272 : f32 to vector<2x256xf32>
    %274 = arith.mulf %26, %273 : vector<2x256xf32>
    %275 = arith.addf %271, %274 : vector<2x256xf32>
    %c67 = arith.constant 67 : index
    %276 = memref.load %arg5[%c67] : memref<98xf32, #tpu.memory_space<smem>>
    %277 = vector.broadcast %276 : f32 to vector<2x256xf32>
    %278 = arith.mulf %107, %277 : vector<2x256xf32>
    %279 = arith.addf %275, %278 : vector<2x256xf32>
    %c68 = arith.constant 68 : index
    %280 = memref.load %arg5[%c68] : memref<98xf32, #tpu.memory_space<smem>>
    %281 = vector.broadcast %280 : f32 to vector<2x256xf32>
    %282 = arith.mulf %115, %281 : vector<2x256xf32>
    %283 = arith.addf %279, %282 : vector<2x256xf32>
    %c69 = arith.constant 69 : index
    %284 = memref.load %arg5[%c69] : memref<98xf32, #tpu.memory_space<smem>>
    %285 = vector.broadcast %284 : f32 to vector<2x256xf32>
    %286 = arith.mulf %123, %285 : vector<2x256xf32>
    %287 = arith.addf %283, %286 : vector<2x256xf32>
    %288 = arith.addf %260, %287 : vector<2x256xf32>
    %c21 = arith.constant 21 : index
    %289 = memref.load %arg5[%c21] : memref<98xf32, #tpu.memory_space<smem>>
    %290 = vector.broadcast %289 : f32 to vector<2x256xf32>
    %291 = arith.mulf %35, %290 : vector<2x256xf32>
    %c22 = arith.constant 22 : index
    %292 = memref.load %arg5[%c22] : memref<98xf32, #tpu.memory_space<smem>>
    %293 = vector.broadcast %292 : f32 to vector<2x256xf32>
    %294 = arith.mulf %43, %293 : vector<2x256xf32>
    %295 = arith.addf %291, %294 : vector<2x256xf32>
    %c23 = arith.constant 23 : index
    %296 = memref.load %arg5[%c23] : memref<98xf32, #tpu.memory_space<smem>>
    %297 = vector.broadcast %296 : f32 to vector<2x256xf32>
    %298 = arith.mulf %51, %297 : vector<2x256xf32>
    %299 = arith.addf %295, %298 : vector<2x256xf32>
    %c24 = arith.constant 24 : index
    %300 = memref.load %arg5[%c24] : memref<98xf32, #tpu.memory_space<smem>>
    %301 = vector.broadcast %300 : f32 to vector<2x256xf32>
    %302 = arith.mulf %23, %301 : vector<2x256xf32>
    %303 = arith.addf %299, %302 : vector<2x256xf32>
    %c25 = arith.constant 25 : index
    %304 = memref.load %arg5[%c25] : memref<98xf32, #tpu.memory_space<smem>>
    %305 = vector.broadcast %304 : f32 to vector<2x256xf32>
    %306 = arith.mulf %59, %305 : vector<2x256xf32>
    %307 = arith.addf %303, %306 : vector<2x256xf32>
    %c26 = arith.constant 26 : index
    %308 = memref.load %arg5[%c26] : memref<98xf32, #tpu.memory_space<smem>>
    %309 = vector.broadcast %308 : f32 to vector<2x256xf32>
    %310 = arith.mulf %67, %309 : vector<2x256xf32>
    %311 = arith.addf %307, %310 : vector<2x256xf32>
    %c27 = arith.constant 27 : index
    %312 = memref.load %arg5[%c27] : memref<98xf32, #tpu.memory_space<smem>>
    %313 = vector.broadcast %312 : f32 to vector<2x256xf32>
    %314 = arith.mulf %75, %313 : vector<2x256xf32>
    %315 = arith.addf %311, %314 : vector<2x256xf32>
    %c70 = arith.constant 70 : index
    %316 = memref.load %arg5[%c70] : memref<98xf32, #tpu.memory_space<smem>>
    %317 = vector.broadcast %316 : f32 to vector<2x256xf32>
    %318 = arith.mulf %83, %317 : vector<2x256xf32>
    %c71 = arith.constant 71 : index
    %319 = memref.load %arg5[%c71] : memref<98xf32, #tpu.memory_space<smem>>
    %320 = vector.broadcast %319 : f32 to vector<2x256xf32>
    %321 = arith.mulf %91, %320 : vector<2x256xf32>
    %322 = arith.addf %318, %321 : vector<2x256xf32>
    %c72 = arith.constant 72 : index
    %323 = memref.load %arg5[%c72] : memref<98xf32, #tpu.memory_space<smem>>
    %324 = vector.broadcast %323 : f32 to vector<2x256xf32>
    %325 = arith.mulf %99, %324 : vector<2x256xf32>
    %326 = arith.addf %322, %325 : vector<2x256xf32>
    %c73 = arith.constant 73 : index
    %327 = memref.load %arg5[%c73] : memref<98xf32, #tpu.memory_space<smem>>
    %328 = vector.broadcast %327 : f32 to vector<2x256xf32>
    %329 = arith.mulf %26, %328 : vector<2x256xf32>
    %330 = arith.addf %326, %329 : vector<2x256xf32>
    %c74 = arith.constant 74 : index
    %331 = memref.load %arg5[%c74] : memref<98xf32, #tpu.memory_space<smem>>
    %332 = vector.broadcast %331 : f32 to vector<2x256xf32>
    %333 = arith.mulf %107, %332 : vector<2x256xf32>
    %334 = arith.addf %330, %333 : vector<2x256xf32>
    %c75 = arith.constant 75 : index
    %335 = memref.load %arg5[%c75] : memref<98xf32, #tpu.memory_space<smem>>
    %336 = vector.broadcast %335 : f32 to vector<2x256xf32>
    %337 = arith.mulf %115, %336 : vector<2x256xf32>
    %338 = arith.addf %334, %337 : vector<2x256xf32>
    %c76 = arith.constant 76 : index
    %339 = memref.load %arg5[%c76] : memref<98xf32, #tpu.memory_space<smem>>
    %340 = vector.broadcast %339 : f32 to vector<2x256xf32>
    %341 = arith.mulf %123, %340 : vector<2x256xf32>
    %342 = arith.addf %338, %341 : vector<2x256xf32>
    %343 = arith.addf %315, %342 : vector<2x256xf32>
    %c28 = arith.constant 28 : index
    %344 = memref.load %arg5[%c28] : memref<98xf32, #tpu.memory_space<smem>>
    %345 = vector.broadcast %344 : f32 to vector<2x256xf32>
    %346 = arith.mulf %35, %345 : vector<2x256xf32>
    %c29 = arith.constant 29 : index
    %347 = memref.load %arg5[%c29] : memref<98xf32, #tpu.memory_space<smem>>
    %348 = vector.broadcast %347 : f32 to vector<2x256xf32>
    %349 = arith.mulf %43, %348 : vector<2x256xf32>
    %350 = arith.addf %346, %349 : vector<2x256xf32>
    %c30 = arith.constant 30 : index
    %351 = memref.load %arg5[%c30] : memref<98xf32, #tpu.memory_space<smem>>
    %352 = vector.broadcast %351 : f32 to vector<2x256xf32>
    %353 = arith.mulf %51, %352 : vector<2x256xf32>
    %354 = arith.addf %350, %353 : vector<2x256xf32>
    %c31 = arith.constant 31 : index
    %355 = memref.load %arg5[%c31] : memref<98xf32, #tpu.memory_space<smem>>
    %356 = vector.broadcast %355 : f32 to vector<2x256xf32>
    %357 = arith.mulf %23, %356 : vector<2x256xf32>
    %358 = arith.addf %354, %357 : vector<2x256xf32>
    %c32 = arith.constant 32 : index
    %359 = memref.load %arg5[%c32] : memref<98xf32, #tpu.memory_space<smem>>
    %360 = vector.broadcast %359 : f32 to vector<2x256xf32>
    %361 = arith.mulf %59, %360 : vector<2x256xf32>
    %362 = arith.addf %358, %361 : vector<2x256xf32>
    %c33 = arith.constant 33 : index
    %363 = memref.load %arg5[%c33] : memref<98xf32, #tpu.memory_space<smem>>
    %364 = vector.broadcast %363 : f32 to vector<2x256xf32>
    %365 = arith.mulf %67, %364 : vector<2x256xf32>
    %366 = arith.addf %362, %365 : vector<2x256xf32>
    %c34 = arith.constant 34 : index
    %367 = memref.load %arg5[%c34] : memref<98xf32, #tpu.memory_space<smem>>
    %368 = vector.broadcast %367 : f32 to vector<2x256xf32>
    %369 = arith.mulf %75, %368 : vector<2x256xf32>
    %370 = arith.addf %366, %369 : vector<2x256xf32>
    %c77 = arith.constant 77 : index
    %371 = memref.load %arg5[%c77] : memref<98xf32, #tpu.memory_space<smem>>
    %372 = vector.broadcast %371 : f32 to vector<2x256xf32>
    %373 = arith.mulf %83, %372 : vector<2x256xf32>
    %c78 = arith.constant 78 : index
    %374 = memref.load %arg5[%c78] : memref<98xf32, #tpu.memory_space<smem>>
    %375 = vector.broadcast %374 : f32 to vector<2x256xf32>
    %376 = arith.mulf %91, %375 : vector<2x256xf32>
    %377 = arith.addf %373, %376 : vector<2x256xf32>
    %c79 = arith.constant 79 : index
    %378 = memref.load %arg5[%c79] : memref<98xf32, #tpu.memory_space<smem>>
    %379 = vector.broadcast %378 : f32 to vector<2x256xf32>
    %380 = arith.mulf %99, %379 : vector<2x256xf32>
    %381 = arith.addf %377, %380 : vector<2x256xf32>
    %c80 = arith.constant 80 : index
    %382 = memref.load %arg5[%c80] : memref<98xf32, #tpu.memory_space<smem>>
    %383 = vector.broadcast %382 : f32 to vector<2x256xf32>
    %384 = arith.mulf %26, %383 : vector<2x256xf32>
    %385 = arith.addf %381, %384 : vector<2x256xf32>
    %c81 = arith.constant 81 : index
    %386 = memref.load %arg5[%c81] : memref<98xf32, #tpu.memory_space<smem>>
    %387 = vector.broadcast %386 : f32 to vector<2x256xf32>
    %388 = arith.mulf %107, %387 : vector<2x256xf32>
    %389 = arith.addf %385, %388 : vector<2x256xf32>
    %c82 = arith.constant 82 : index
    %390 = memref.load %arg5[%c82] : memref<98xf32, #tpu.memory_space<smem>>
    %391 = vector.broadcast %390 : f32 to vector<2x256xf32>
    %392 = arith.mulf %115, %391 : vector<2x256xf32>
    %393 = arith.addf %389, %392 : vector<2x256xf32>
    %c83 = arith.constant 83 : index
    %394 = memref.load %arg5[%c83] : memref<98xf32, #tpu.memory_space<smem>>
    %395 = vector.broadcast %394 : f32 to vector<2x256xf32>
    %396 = arith.mulf %123, %395 : vector<2x256xf32>
    %397 = arith.addf %393, %396 : vector<2x256xf32>
    %398 = arith.addf %370, %397 : vector<2x256xf32>
    %c35 = arith.constant 35 : index
    %399 = memref.load %arg5[%c35] : memref<98xf32, #tpu.memory_space<smem>>
    %400 = vector.broadcast %399 : f32 to vector<2x256xf32>
    %401 = arith.mulf %35, %400 : vector<2x256xf32>
    %c36 = arith.constant 36 : index
    %402 = memref.load %arg5[%c36] : memref<98xf32, #tpu.memory_space<smem>>
    %403 = vector.broadcast %402 : f32 to vector<2x256xf32>
    %404 = arith.mulf %43, %403 : vector<2x256xf32>
    %405 = arith.addf %401, %404 : vector<2x256xf32>
    %c37 = arith.constant 37 : index
    %406 = memref.load %arg5[%c37] : memref<98xf32, #tpu.memory_space<smem>>
    %407 = vector.broadcast %406 : f32 to vector<2x256xf32>
    %408 = arith.mulf %51, %407 : vector<2x256xf32>
    %409 = arith.addf %405, %408 : vector<2x256xf32>
    %c38 = arith.constant 38 : index
    %410 = memref.load %arg5[%c38] : memref<98xf32, #tpu.memory_space<smem>>
    %411 = vector.broadcast %410 : f32 to vector<2x256xf32>
    %412 = arith.mulf %23, %411 : vector<2x256xf32>
    %413 = arith.addf %409, %412 : vector<2x256xf32>
    %c39 = arith.constant 39 : index
    %414 = memref.load %arg5[%c39] : memref<98xf32, #tpu.memory_space<smem>>
    %415 = vector.broadcast %414 : f32 to vector<2x256xf32>
    %416 = arith.mulf %59, %415 : vector<2x256xf32>
    %417 = arith.addf %413, %416 : vector<2x256xf32>
    %c40 = arith.constant 40 : index
    %418 = memref.load %arg5[%c40] : memref<98xf32, #tpu.memory_space<smem>>
    %419 = vector.broadcast %418 : f32 to vector<2x256xf32>
    %420 = arith.mulf %67, %419 : vector<2x256xf32>
    %421 = arith.addf %417, %420 : vector<2x256xf32>
    %c41 = arith.constant 41 : index
    %422 = memref.load %arg5[%c41] : memref<98xf32, #tpu.memory_space<smem>>
    %423 = vector.broadcast %422 : f32 to vector<2x256xf32>
    %424 = arith.mulf %75, %423 : vector<2x256xf32>
    %425 = arith.addf %421, %424 : vector<2x256xf32>
    %c84 = arith.constant 84 : index
    %426 = memref.load %arg5[%c84] : memref<98xf32, #tpu.memory_space<smem>>
    %427 = vector.broadcast %426 : f32 to vector<2x256xf32>
    %428 = arith.mulf %83, %427 : vector<2x256xf32>
    %c85 = arith.constant 85 : index
    %429 = memref.load %arg5[%c85] : memref<98xf32, #tpu.memory_space<smem>>
    %430 = vector.broadcast %429 : f32 to vector<2x256xf32>
    %431 = arith.mulf %91, %430 : vector<2x256xf32>
    %432 = arith.addf %428, %431 : vector<2x256xf32>
    %c86 = arith.constant 86 : index
    %433 = memref.load %arg5[%c86] : memref<98xf32, #tpu.memory_space<smem>>
    %434 = vector.broadcast %433 : f32 to vector<2x256xf32>
    %435 = arith.mulf %99, %434 : vector<2x256xf32>
    %436 = arith.addf %432, %435 : vector<2x256xf32>
    %c87 = arith.constant 87 : index
    %437 = memref.load %arg5[%c87] : memref<98xf32, #tpu.memory_space<smem>>
    %438 = vector.broadcast %437 : f32 to vector<2x256xf32>
    %439 = arith.mulf %26, %438 : vector<2x256xf32>
    %440 = arith.addf %436, %439 : vector<2x256xf32>
    %c88 = arith.constant 88 : index
    %441 = memref.load %arg5[%c88] : memref<98xf32, #tpu.memory_space<smem>>
    %442 = vector.broadcast %441 : f32 to vector<2x256xf32>
    %443 = arith.mulf %107, %442 : vector<2x256xf32>
    %444 = arith.addf %440, %443 : vector<2x256xf32>
    %c89 = arith.constant 89 : index
    %445 = memref.load %arg5[%c89] : memref<98xf32, #tpu.memory_space<smem>>
    %446 = vector.broadcast %445 : f32 to vector<2x256xf32>
    %447 = arith.mulf %115, %446 : vector<2x256xf32>
    %448 = arith.addf %444, %447 : vector<2x256xf32>
    %c90 = arith.constant 90 : index
    %449 = memref.load %arg5[%c90] : memref<98xf32, #tpu.memory_space<smem>>
    %450 = vector.broadcast %449 : f32 to vector<2x256xf32>
    %451 = arith.mulf %123, %450 : vector<2x256xf32>
    %452 = arith.addf %448, %451 : vector<2x256xf32>
    %453 = arith.addf %425, %452 : vector<2x256xf32>
    %c42 = arith.constant 42 : index
    %454 = memref.load %arg5[%c42] : memref<98xf32, #tpu.memory_space<smem>>
    %455 = vector.broadcast %454 : f32 to vector<2x256xf32>
    %456 = arith.mulf %35, %455 : vector<2x256xf32>
    %c43 = arith.constant 43 : index
    %457 = memref.load %arg5[%c43] : memref<98xf32, #tpu.memory_space<smem>>
    %458 = vector.broadcast %457 : f32 to vector<2x256xf32>
    %459 = arith.mulf %43, %458 : vector<2x256xf32>
    %460 = arith.addf %456, %459 : vector<2x256xf32>
    %c44 = arith.constant 44 : index
    %461 = memref.load %arg5[%c44] : memref<98xf32, #tpu.memory_space<smem>>
    %462 = vector.broadcast %461 : f32 to vector<2x256xf32>
    %463 = arith.mulf %51, %462 : vector<2x256xf32>
    %464 = arith.addf %460, %463 : vector<2x256xf32>
    %c45 = arith.constant 45 : index
    %465 = memref.load %arg5[%c45] : memref<98xf32, #tpu.memory_space<smem>>
    %466 = vector.broadcast %465 : f32 to vector<2x256xf32>
    %467 = arith.mulf %23, %466 : vector<2x256xf32>
    %468 = arith.addf %464, %467 : vector<2x256xf32>
    %c46 = arith.constant 46 : index
    %469 = memref.load %arg5[%c46] : memref<98xf32, #tpu.memory_space<smem>>
    %470 = vector.broadcast %469 : f32 to vector<2x256xf32>
    %471 = arith.mulf %59, %470 : vector<2x256xf32>
    %472 = arith.addf %468, %471 : vector<2x256xf32>
    %c47 = arith.constant 47 : index
    %473 = memref.load %arg5[%c47] : memref<98xf32, #tpu.memory_space<smem>>
    %474 = vector.broadcast %473 : f32 to vector<2x256xf32>
    %475 = arith.mulf %67, %474 : vector<2x256xf32>
    %476 = arith.addf %472, %475 : vector<2x256xf32>
    %c48 = arith.constant 48 : index
    %477 = memref.load %arg5[%c48] : memref<98xf32, #tpu.memory_space<smem>>
    %478 = vector.broadcast %477 : f32 to vector<2x256xf32>
    %479 = arith.mulf %75, %478 : vector<2x256xf32>
    %480 = arith.addf %476, %479 : vector<2x256xf32>
    %c91 = arith.constant 91 : index
    %481 = memref.load %arg5[%c91] : memref<98xf32, #tpu.memory_space<smem>>
    %482 = vector.broadcast %481 : f32 to vector<2x256xf32>
    %483 = arith.mulf %83, %482 : vector<2x256xf32>
    %c92 = arith.constant 92 : index
    %484 = memref.load %arg5[%c92] : memref<98xf32, #tpu.memory_space<smem>>
    %485 = vector.broadcast %484 : f32 to vector<2x256xf32>
    %486 = arith.mulf %91, %485 : vector<2x256xf32>
    %487 = arith.addf %483, %486 : vector<2x256xf32>
    %c93 = arith.constant 93 : index
    %488 = memref.load %arg5[%c93] : memref<98xf32, #tpu.memory_space<smem>>
    %489 = vector.broadcast %488 : f32 to vector<2x256xf32>
    %490 = arith.mulf %99, %489 : vector<2x256xf32>
    %491 = arith.addf %487, %490 : vector<2x256xf32>
    %c94 = arith.constant 94 : index
    %492 = memref.load %arg5[%c94] : memref<98xf32, #tpu.memory_space<smem>>
    %493 = vector.broadcast %492 : f32 to vector<2x256xf32>
    %494 = arith.mulf %26, %493 : vector<2x256xf32>
    %495 = arith.addf %491, %494 : vector<2x256xf32>
    %c95 = arith.constant 95 : index
    %496 = memref.load %arg5[%c95] : memref<98xf32, #tpu.memory_space<smem>>
    %497 = vector.broadcast %496 : f32 to vector<2x256xf32>
    %498 = arith.mulf %107, %497 : vector<2x256xf32>
    %499 = arith.addf %495, %498 : vector<2x256xf32>
    %c96 = arith.constant 96 : index
    %500 = memref.load %arg5[%c96] : memref<98xf32, #tpu.memory_space<smem>>
    %501 = vector.broadcast %500 : f32 to vector<2x256xf32>
    %502 = arith.mulf %115, %501 : vector<2x256xf32>
    %503 = arith.addf %499, %502 : vector<2x256xf32>
    %c97 = arith.constant 97 : index
    %504 = memref.load %arg5[%c97] : memref<98xf32, #tpu.memory_space<smem>>
    %505 = vector.broadcast %504 : f32 to vector<2x256xf32>
    %506 = arith.mulf %123, %505 : vector<2x256xf32>
    %507 = arith.addf %503, %506 : vector<2x256xf32>
    %508 = arith.addf %480, %507 : vector<2x256xf32>
    %c0_30 = arith.constant 0 : index
    %509 = memref.load %arg6[%c0_30] : memref<1xf32, #tpu.memory_space<smem>>
    %510 = vector.broadcast %509 : f32 to vector<2x256xf32>
    %cst_31 = arith.constant 0.000000e+00 : f32
    %511 = vector.broadcast %cst_31 : f32 to vector<2x48xf32>
    %512 = vector.extract_strided_slice %178 {offsets = [0, 0], sizes = [2, 208], strides = [1, 1]} : vector<2x256xf32> to vector<2x208xf32>
    %513 = tpu.concatenate %511, %512 in 1 : vector<2x48xf32>, vector<2x208xf32> -> vector<2x256xf32>
    %514 = arith.addf %510, %513 : vector<2x256xf32>
    %cst_32 = arith.constant 0.000000e+00 : f32
    %515 = vector.broadcast %cst_32 : f32 to vector<2x32xf32>
    %516 = vector.extract_strided_slice %233 {offsets = [0, 0], sizes = [2, 224], strides = [1, 1]} : vector<2x256xf32> to vector<2x224xf32>
    %517 = tpu.concatenate %515, %516 in 1 : vector<2x32xf32>, vector<2x224xf32> -> vector<2x256xf32>
    %518 = arith.addf %514, %517 : vector<2x256xf32>
    %cst_33 = arith.constant 0.000000e+00 : f32
    %519 = vector.broadcast %cst_33 : f32 to vector<2x16xf32>
    %520 = vector.extract_strided_slice %288 {offsets = [0, 0], sizes = [2, 240], strides = [1, 1]} : vector<2x256xf32> to vector<2x240xf32>
    %521 = tpu.concatenate %519, %520 in 1 : vector<2x16xf32>, vector<2x240xf32> -> vector<2x256xf32>
    %522 = arith.addf %518, %521 : vector<2x256xf32>
    %523 = arith.addf %522, %343 : vector<2x256xf32>
    %cst_34 = arith.constant 0.000000e+00 : f32
    %524 = vector.broadcast %cst_34 : f32 to vector<2x16xf32>
    %525 = vector.extract_strided_slice %398 {offsets = [0, 16], sizes = [2, 240], strides = [1, 1]} : vector<2x256xf32> to vector<2x240xf32>
    %526 = tpu.concatenate %525, %524 in 1 : vector<2x240xf32>, vector<2x16xf32> -> vector<2x256xf32>
    %527 = arith.addf %523, %526 : vector<2x256xf32>
    %cst_35 = arith.constant 0.000000e+00 : f32
    %528 = vector.broadcast %cst_35 : f32 to vector<2x32xf32>
    %529 = vector.extract_strided_slice %453 {offsets = [0, 32], sizes = [2, 224], strides = [1, 1]} : vector<2x256xf32> to vector<2x224xf32>
    %530 = tpu.concatenate %529, %528 in 1 : vector<2x224xf32>, vector<2x32xf32> -> vector<2x256xf32>
    %531 = arith.addf %527, %530 : vector<2x256xf32>
    %cst_36 = arith.constant 0.000000e+00 : f32
    %532 = vector.broadcast %cst_36 : f32 to vector<2x48xf32>
    %533 = vector.extract_strided_slice %508 {offsets = [0, 48], sizes = [2, 208], strides = [1, 1]} : vector<2x256xf32> to vector<2x208xf32>
    %534 = tpu.concatenate %533, %532 in 1 : vector<2x208xf32>, vector<2x48xf32> -> vector<2x256xf32>
    %535 = arith.addf %531, %534 : vector<2x256xf32>
    %536 = arith.negf %535 : vector<2x256xf32>
    %537 = math.exp %536 : vector<2x256xf32>
    %cst_37 = arith.constant 1.000000e+00 : f32
    %538 = vector.broadcast %cst_37 : f32 to vector<2x256xf32>
    %539 = arith.addf %538, %537 : vector<2x256xf32>
    %540 = arith.divf %538, %539 : vector<2x256xf32>
    %541 = vector.shape_cast %540 : vector<2x256xf32> to vector<2x1x256xf32>
    %542 = vector.broadcast %541 : vector<2x1x256xf32> to vector<2x32x256xf32>
    %543 = arith.mulf %22, %542 : vector<2x32x256xf32>
    %544 = arith.addf %543, %0 : vector<2x32x256xf32>
    %c0_38 = arith.constant 0 : index
    %c0_39 = arith.constant 0 : index
    %c0_40 = arith.constant 0 : index
    %545 = vector.load %arg7[%c0_38, %c0_39, %c0_40] : memref<2x32x256xf32, #tpu.memory_space<vmem>>, vector<2x32x256xf32>
    tpu.vector_store %arg7[%c0_38, %c0_39, %c0_40], %544 {strides = array<i32>} : memref<2x32x256xf32, #tpu.memory_space<vmem>>, vector<2x32x256xf32>,
    return
  }
  func.func @transform_0(%arg0: i32) -> (i32, i32, i32) {
    %c0_i32 = arith.constant 0 : i32
    %c0_i32_0 = arith.constant 0 : i32
    %c0_i32_1 = arith.constant 0 : i32
    return %arg0, %c0_i32, %c0_i32_0 : i32, i32, i32
  }
  func.func @transform_1(%arg0: i32) -> (i32, i32) {
    %c0_i32 = arith.constant 0 : i32
    %c0_i32_0 = arith.constant 0 : i32
    %c0_i32_1 = arith.constant 0 : i32
    return %c0_i32, %c0_i32_0 : i32, i32
  }
  func.func @transform_2(%arg0: i32) -> (i32, i32) {
    %c0_i32 = arith.constant 0 : i32
    %c0_i32_0 = arith.constant 0 : i32
    %c0_i32_1 = arith.constant 0 : i32
    return %c0_i32, %c0_i32_0 : i32, i32
  }
  func.func @transform_3(%arg0: i32) -> (i32, i32) {
    %c0_i32 = arith.constant 0 : i32
    %c0_i32_0 = arith.constant 0 : i32
    %c0_i32_1 = arith.constant 0 : i32
    return %c0_i32, %c0_i32_0 : i32, i32
  }
  func.func @transform_4(%arg0: i32) -> i32 {
    %c0_i32 = arith.constant 0 : i32
    %c0_i32_0 = arith.constant 0 : i32
    return %c0_i32 : i32
  }
  func.func @transform_5(%arg0: i32) -> i32 {
    %c0_i32 = arith.constant 0 : i32
    %c0_i32_0 = arith.constant 0 : i32
    return %c0_i32 : i32
  }
  func.func @transform_6(%arg0: i32) -> (i32, i32, i32) {
    %c0_i32 = arith.constant 0 : i32
    %c0_i32_0 = arith.constant 0 : i32
    %c0_i32_1 = arith.constant 0 : i32
    return %arg0, %c0_i32, %c0_i32_0 : i32, i32, i32
  }
}

</mosaic_0001>

<llo_original>
// kernel: tpu_custom_call.1
$region0: #{tpu_custom_call.1}
  #allocation0 [shape = 'u32[]', space=smem, size = 0x4, offset = 0x4, fixed_abs, tag = 'smem constant byte address 0x4 - core index']
  #allocation1 [shape = 'u32[144,128]{1,0:T(1,128)}', space=vmem, size = 0x12000, scoped, tag = 'internal scratch']
  #allocation2 [shape = 'f32[1]{0:T(128)S(6)}', space=smem, size = 0x200, scoped, tag = 'scoped memory for tpu_custom_call.1']
  %s0 = inlined_call_operand.hbm [shape: f32[2,32,256], index: 0, kind: input, shape index: {}]
  %s1 = inlined_call_operand.vmem [shape: f32[32,8], index: 1, kind: input, shape index: {}]
  %s2 = inlined_call_operand.vmem [shape: f32[8,32], index: 2, kind: input, shape index: {}]
  %s3 = inlined_call_operand.vmem [shape: f32[7,256], index: 3, kind: input, shape index: {}]
  %s4 = inlined_call_operand.vmem [shape: f32[98], index: 4, kind: input, shape index: {}]
  %s5 = inlined_call_operand.<no memory space> [shape: f32[1], index: 5, kind: input, shape index: {}]
  %s6 = inlined_call_operand.hbm [shape: f32[2,32,256], index: 6, kind: output, shape index: {}]
  %s7 = sld [smem:[#allocation0]]
  $region42: #{tpu_custom_call.1} parent=0
    _
  %s9 = ssub.s32 1, %s7
  %s10 = scalar_select 0, %s9, %s7
  %11 = sst [smem:[#allocation2]] %s5
  $region1: #{tpu_custom_call.1} parent=0
    #allocation3 [shape = 'u8[65536]{0}', space=vmem, size = 0x10000, scoped, tag = 'input window, operand 0, single buffered']
    #allocation4 [shape = 's32[1]{0}', space=sflag, size = 0x4, scoped, tag = 'scoped memory for tpu_custom_call.1']
    #allocation5 [shape = 's32[1]{0}', space=sflag, size = 0x4, scoped, tag = 'scoped memory for tpu_custom_call.1']
    #allocation6 [shape = 's32[1]{0}', space=sflag, size = 0x4, scoped, tag = 'scoped memory for tpu_custom_call.1']
    #allocation7 [shape = 'u8[512]{0}', space=smem, size = 0x200, scoped, tag = 'input window, operand 4, single buffered']
    #allocation8 [shape = 'u8[65536]{0}', space=vmem, size = 0x10000, scoped, tag = 'output window, operand 0, single buffered']
    %12 = vsyncpa [#allocation4], 0
    %13 = vsyncpa [#allocation6], 0
    %14 = vsyncpa [#allocation5], 0
    // Predicated region
    $region2: #{tpu_custom_call.1} parent=1 // pred_check
      _
    $region3: #{tpu_custom_call.1} parent=1 // pred_check_branch
      %16 = sbr.rel (0) target = $region5
    $region4: #{tpu_custom_call.1} parent=1 // pred_region
      %s18 = ssub.s32 2048, 2048
      %19 = vsyncadd [#allocation4], %s18
      %s20 = sshll.u32 [#allocation3], 4
      %s21 = int_to_ptr.vmem [resolvable:$true] %s20
      %26 = dma.hbm_to_vmem [thread:$0]  %s0, 2048, %s21, [#allocation4], 256, 256, 16
    $region5: #{tpu_custom_call.1} parent=1 // pred_fallthru
      _
    // Predicated region
    $region6: #{tpu_custom_call.1} parent=1 // pred_check
      _
    $region7: #{tpu_custom_call.1} parent=1 // pred_check_branch
      %28 = sbr.rel (0) target = $region9
    $region8: #{tpu_custom_call.1} parent=1 // pred_region
      _
    $region9: #{tpu_custom_call.1} parent=1 // pred_fallthru
      _
    // Predicated region
    $region10: #{tpu_custom_call.1} parent=1 // pred_check
      _
    $region11: #{tpu_custom_call.1} parent=1 // pred_check_branch
      %30 = sbr.rel (0) target = $region13
    $region12: #{tpu_custom_call.1} parent=1 // pred_region
      _
    $region13: #{tpu_custom_call.1} parent=1 // pred_fallthru
      _
    // Predicated region
    $region14: #{tpu_custom_call.1} parent=1 // pred_check
      _
    $region15: #{tpu_custom_call.1} parent=1 // pred_check_branch
      %32 = sbr.rel (0) target = $region17
    $region16: #{tpu_custom_call.1} parent=1 // pred_region
      _
    $region17: #{tpu_custom_call.1} parent=1 // pred_fallthru
      _
    // Predicated region
    $region18: #{tpu_custom_call.1} parent=1 // pred_check
      _
    $region19: #{tpu_custom_call.1} parent=1 // pred_check_branch
      %34 = sbr.rel (0) target = $region21
    $region20: #{tpu_custom_call.1} parent=1 // pred_region
      %s36 = ssub.s32 16, 16
      %37 = vsyncadd [#allocation6], %s36
      %s39 = sshll.u32 %s4, 4
      %s40 = int_to_ptr.vmem [resolvable:$true] %s39
      %42 = dma.vmem_to_smem %s40, 16, [#allocation7], [#allocation6]
    $region21: #{tpu_custom_call.1} parent=1 // pred_fallthru
      _
    // Predicated region
    $region22: #{tpu_custom_call.1} parent=1 // pred_check
      _
    $region23: #{tpu_custom_call.1} parent=1 // pred_check_branch
      %44 = sbr.rel (0) target = $region25
    $region24: #{tpu_custom_call.1} parent=1 // pred_region
      _
    $region25: #{tpu_custom_call.1} parent=1 // pred_fallthru
      _
    // Predicated region
    $region26: #{tpu_custom_call.1} parent=1 // pred_check
      _
    $region27: #{tpu_custom_call.1} parent=1 // pred_check_branch
      %46 = sbr.rel (0) target = $region29
    $region28: #{tpu_custom_call.1} parent=1 // pred_region
      %47 = dma.done [#allocation4], 2048
    $region29: #{tpu_custom_call.1} parent=1 // pred_fallthru
      _
    // Predicated region
    $region30: #{tpu_custom_call.1} parent=1 // pred_check
      _
    $region31: #{tpu_custom_call.1} parent=1 // pred_check_branch
      %49 = sbr.rel (0) target = $region33
    $region32: #{tpu_custom_call.1} parent=1 // pred_region
      %50 = dma.done [#allocation6], 16
    $region33: #{tpu_custom_call.1} parent=1 // pred_fallthru
      _
    %51 = sfence
    %v52 = vld [vmem:[#allocation3] sm:$0xff]
    %v53 = vld [vmem:[#allocation3 + $0x8] sm:$0xff]
    %v54 = vld [vmem:[#allocation3 + $0x10] sm:$0xff]
    %v55 = vld [vmem:[#allocation3 + $0x18] sm:$0xff]
    %v56 = vld [vmem:[#allocation3 + $0x20] sm:$0xff]
    %v57 = vld [vmem:[#allocation3 + $0x28] sm:$0xff]
    %v58 = vld [vmem:[#allocation3 + $0x30] sm:$0xff]
    %v59 = vld [vmem:[#allocation3 + $0x38] sm:$0xff]
    %v60 = vld [vmem:[#allocation3 + $0x40] sm:$0xff]
    %v61 = vld [vmem:[#allocation3 + $0x48] sm:$0xff]
    %v62 = vld [vmem:[#allocation3 + $0x50] sm:$0xff]
    %v63 = vld [vmem:[#allocation3 + $0x58] sm:$0xff]
    %v64 = vld [vmem:[#allocation3 + $0x60] sm:$0xff]
    %v65 = vld [vmem:[#allocation3 + $0x68] sm:$0xff]
    %v66 = vld [vmem:[#allocation3 + $0x70] sm:$0xff]
    %v67 = vld [vmem:[#allocation3 + $0x78] sm:$0xff]
    %v68 = vmax.f32 %v52, %v53
    %69 = vmax.xlane.f32.xlu0 %v68
    %v70 = vpop.xlane.xlu0 %69
    %v71 = vmax.f32 %v54, %v55
    %72 = vmax.xlane.f32.xlu0 %v71
    %v73 = vpop.xlane.xlu0 %72
    %v74 = vmax.f32 %v56, %v57
    %75 = vmax.xlane.f32.xlu0 %v74
    %v76 = vpop.xlane.xlu0 %75
    %v77 = vmax.f32 %v58, %v59
    %78 = vmax.xlane.f32.xlu0 %v77
    %v79 = vpop.xlane.xlu0 %78
    %v80 = vmax.f32 %v60, %v61
    %81 = vmax.xlane.f32.xlu0 %v80
    %v82 = vpop.xlane.xlu0 %81
    %v83 = vmax.f32 %v62, %v63
    %84 = vmax.xlane.f32.xlu0 %v83
    %v85 = vpop.xlane.xlu0 %84
    %v86 = vmax.f32 %v64, %v65
    %87 = vmax.xlane.f32.xlu0 %v86
    %v88 = vpop.xlane.xlu0 %87
    %v89 = vmax.f32 %v66, %v67
    %90 = vmax.xlane.f32.xlu0 %v89
    %v91 = vpop.xlane.xlu0 %90
    %v92 = vadd.f32 %v52, %v53
    %93 = vadd.xlane.f32.xlu0 %v92
    %v94 = vpop.xlane.xlu0 %93
    %v95 = vadd.f32 %v54, %v55
    %96 = vadd.xlane.f32.xlu0 %v95
    %v97 = vpop.xlane.xlu0 %96
    %v98 = vadd.f32 %v56, %v57
    %99 = vadd.xlane.f32.xlu0 %v98
    %v100 = vpop.xlane.xlu0 %99
    %v101 = vadd.f32 %v58, %v59
    %102 = vadd.xlane.f32.xlu0 %v101
    %v103 = vpop.xlane.xlu0 %102
    %v104 = vadd.f32 %v60, %v61
    %105 = vadd.xlane.f32.xlu0 %v104
    %v106 = vpop.xlane.xlu0 %105
    %v107 = vadd.f32 %v62, %v63
    %108 = vadd.xlane.f32.xlu0 %v107
    %v109 = vpop.xlane.xlu0 %108
    %v110 = vadd.f32 %v64, %v65
    %111 = vadd.xlane.f32.xlu0 %v110
    %v112 = vpop.xlane.xlu0 %111
    %v113 = vadd.f32 %v66, %v67
    %114 = vadd.xlane.f32.xlu0 %v113
    %v115 = vpop.xlane.xlu0 %114
    %v116 = vmul.f32 %v94, 0.00390625
    %v117 = vmul.f32 %v97, 0.00390625
    %v118 = vmul.f32 %v100, 0.00390625
    %v119 = vmul.f32 %v103, 0.00390625
    %v120 = vmul.f32 %v106, 0.00390625
    %v121 = vmul.f32 %v109, 0.00390625
    %v122 = vmul.f32 %v112, 0.00390625
    %v123 = vmul.f32 %v115, 0.00390625
    %v132 = vlaneseq
    %v133 = vand.u32 %v132, 127
    %v134 = vlaneseq
    %v135 = vshrl.u32 %v134, 7
    %v136 = vsub.s32 %v133, %v135
    %v137 = vrot.slane %v70, %v136
    %v138 = vadd.s32 %v133, 4294967288
    %v139 = vlaneseq
    %v140 = vshrl.u32 %v139, 7
    %v141 = vsub.s32 %v138, %v140
    %v142 = vrot.slane %v73, %v141
    %vm143 = vcmask 130112
    %v144 = vsel %vm143, %v142, %v137
    %v145 = vadd.s32 %v133, 4294967280
    %v146 = vlaneseq
    %v147 = vshrl.u32 %v146, 7
    %v148 = vsub.s32 %v145, %v147
    %v149 = vrot.slane %v76, %v148
    %vm150 = vcmask 195712
    %v151 = vsel %vm150, %v149, %v144
    %v152 = vadd.s32 %v133, 4294967272
    %v153 = vlaneseq
    %v154 = vshrl.u32 %v153, 7
    %v155 = vsub.s32 %v152, %v154
    %v156 = vrot.slane %v79, %v155
    %vm157 = vcmask 261312
    %v158 = vsel %vm157, %v156, %v151
    %v159 = vlaneseq
    %v160 = vshrl.u32 %v159, 7
    %v161 = vsub.s32 %v133, %v160
    %v162 = vrot.slane %v82, %v161
    %v163 = vlaneseq
    %v164 = vshrl.u32 %v163, 7
    %v165 = vsub.s32 %v138, %v164
    %v166 = vrot.slane %v85, %v165
    %v167 = vsel %vm143, %v166, %v162
    %v168 = vlaneseq
    %v169 = vshrl.u32 %v168, 7
    %v170 = vsub.s32 %v145, %v169
    %v171 = vrot.slane %v88, %v170
    %v172 = vsel %vm150, %v171, %v167
    %v173 = vlaneseq
    %v174 = vshrl.u32 %v173, 7
    %v175 = vsub.s32 %v152, %v174
    %v176 = vrot.slane %v91, %v175
    %v177 = vsel %vm157, %v176, %v172
    %vm178 = vcmask 1041409
    %v179 = vsel %vm178, %v177, %v158
    %v189 = vlaneseq
    %v190 = vshrl.u32 %v189, 7
    %v191 = vsub.s32 %v133, %v190
    %v192 = vrot.slane %v116, %v191
    %v193 = vlaneseq
    %v194 = vshrl.u32 %v193, 7
    %v195 = vsub.s32 %v138, %v194
    %v196 = vrot.slane %v117, %v195
    %v197 = vsel %vm143, %v196, %v192
    %v198 = vlaneseq
    %v199 = vshrl.u32 %v198, 7
    %v200 = vsub.s32 %v145, %v199
    %v201 = vrot.slane %v118, %v200
    %v202 = vsel %vm150, %v201, %v197
    %v203 = vlaneseq
    %v204 = vshrl.u32 %v203, 7
    %v205 = vsub.s32 %v152, %v204
    %v206 = vrot.slane %v119, %v205
    %v207 = vsel %vm157, %v206, %v202
    %v208 = vlaneseq
    %v209 = vshrl.u32 %v208, 7
    %v210 = vsub.s32 %v133, %v209
    %v211 = vrot.slane %v120, %v210
    %v212 = vlaneseq
    %v213 = vshrl.u32 %v212, 7
    %v214 = vsub.s32 %v138, %v213
    %v215 = vrot.slane %v121, %v214
    %v216 = vsel %vm143, %v215, %v211
    %v217 = vlaneseq
    %v218 = vshrl.u32 %v217, 7
    %v219 = vsub.s32 %v145, %v218
    %v220 = vrot.slane %v122, %v219
    %v221 = vsel %vm150, %v220, %v216
    %v222 = vlaneseq
    %v223 = vshrl.u32 %v222, 7
    %v224 = vsub.s32 %v152, %v223
    %v225 = vrot.slane %v123, %v224
    %v226 = vsel %vm157, %v225, %v221
    %vm227 = vcmask 1043459
    %v228 = vsel %vm227, %v226, %v207
    %vm230 = vcmask 1041408
    %v231 = vsel %vm230, %v179, %v228
    %v232 = vld [vmem:[%s1] sm:$0xff]
    %v233 = vld [vmem:[%s1 + $0x8] sm:$0xff]
    %v234 = vld [vmem:[%s1 + $0x10] sm:$0xff]
    %v235 = vld [vmem:[%s1 + $0x18] sm:$0xff]
    %vm236 = vcmask 261120
    %v238 = vsel %vm236, %v231, 0
    %240 = vmatprep.subr.mxu0 0.0
    %241 = vmatpush1.msra.mxu0 0.0
    %242 = vmatprep.subr.mxu0 0.0
    %243 = vmatpush1.msra.mxu0 0.0
    %244 = vmatprep.subr.mxu0 0.0
    %245 = vmatpush1.msra.mxu0 0.0
    %246 = vmatprep.subr.mxu0 0.0
    %247 = vmatpush1.msra.mxu0 0.0
    %248 = vmatprep.subr.mxu0 0.0
    %249 = vmatpush1.msra.mxu0 0.0
    %250 = vmatprep.subr.mxu0 0.0
    %251 = vmatpush1.msra.mxu0 0.0
    %252 = vmatprep.subr.mxu0 0.0
    %253 = vmatpush1.msra.mxu0 0.0
    %254 = vmatprep.subr.mxu0 0.0
    %255 = vmatpush1.msra.mxu0 0.0
    %256 = vmatprep.subr.mxu0 0.0
    %257 = vmatpush1.msra.mxu0 0.0
    %258 = vmatprep.subr.mxu0 0.0
    %259 = vmatpush1.msra.mxu0 0.0
    %260 = vmatprep.subr.mxu0 0.0
    %261 = vmatpush1.msra.mxu0 0.0
    %262 = vmatprep.subr.mxu0 0.0
    %263 = vmatpush1.msra.mxu0 0.0
    %264 = vmatprep.subr.mxu0 0.0
    %265 = vmatpush1.msra.mxu0 %v235
    %266 = vmatprep.subr.mxu0 0.0
    %267 = vmatpush1.msra.mxu0 %v234
    %268 = vmatprep.subr.mxu0 0.0
    %269 = vmatpush1.msra.mxu0 %v233
    %270 = vmatprep.subr.mxu0 0.0
    %271 = vmatpush1.msra.mxu0 %v232
    %272 = vmatprep.subr.mxu0 0.0
    %273 = vmatpush2.msra.mxu0 0.0
    %274 = vmatprep.subr.mxu0 0.0
    %275 = vmatpush2.msra.mxu0 0.0
    %276 = vmatprep.subr.mxu0 0.0
    %277 = vmatpush2.msra.mxu0 0.0
    %278 = vmatprep.subr.mxu0 0.0
    %279 = vmatpush2.msra.mxu0 0.0
    %280 = vmatprep.subr.mxu0 0.0
    %281 = vmatpush2.msra.mxu0 0.0
    %282 = vmatprep.subr.mxu0 0.0
    %283 = vmatpush2.msra.mxu0 0.0
    %284 = vmatprep.subr.mxu0 0.0
    %285 = vmatpush2.msra.mxu0 0.0
    %286 = vmatprep.subr.mxu0 0.0
    %287 = vmatpush2.msra.mxu0 0.0
    %288 = vmatprep.subr.mxu0 0.0
    %289 = vmatpush2.msra.mxu0 0.0
    %290 = vmatprep.subr.mxu0 0.0
    %291 = vmatpush2.msra.mxu0 0.0
    %292 = vmatprep.subr.mxu0 0.0
    %293 = vmatpush2.msra.mxu0 0.0
    %294 = vmatprep.subr.mxu0 0.0
    %295 = vmatpush2.msra.mxu0 0.0
    %296 = vmatprep.subr.mxu0 0.0
    %297 = vmatpush2.msra.mxu0 0.0
    %298 = vmatprep.subr.mxu0 0.0
    %299 = vmatpush2.msra.mxu0 0.0
    %300 = vmatprep.subr.mxu0 0.0
    %301 = vmatpush2.msra.mxu0 0.0
    %302 = vmatprep.subr.mxu0 0.0
    %303 = vmatpush2.msra.mxu0 0.0
    %304 = vmatprep.mubr.f32.mxu0 0.0
    %305 = vmatmul.mubr.f32.gmra.mxu0 %v238
    %v306 = vpop.f32.mrf.mxu0
    %v307 = vadd.f32 0.0, %v306
    %v308 = vpop.f32.mrf.mxu0
    %309 = vdwg.mxu0
    %v310 = vmax.f32 %v307, 0.0
    %v311 = vld [vmem:[%s2] sm:$0xff]
    %vm312 = vcmask 64512
    %v314 = vsel %vm312, %v310, 0
    %316 = vmatprep.subr.mxu0 0.0
    %317 = vmatpush1.msra.mxu0 0.0
    %318 = vmatprep.subr.mxu0 0.0
    %319 = vmatpush1.msra.mxu0 0.0
    %320 = vmatprep.subr.mxu0 0.0
    %321 = vmatpush1.msra.mxu0 0.0
    %322 = vmatprep.subr.mxu0 0.0
    %323 = vmatpush1.msra.mxu0 0.0
    %324 = vmatprep.subr.mxu0 0.0
    %325 = vmatpush1.msra.mxu0 0.0
    %326 = vmatprep.subr.mxu0 0.0
    %327 = vmatpush1.msra.mxu0 0.0
    %328 = vmatprep.subr.mxu0 0.0
    %329 = vmatpush1.msra.mxu0 0.0
    %330 = vmatprep.subr.mxu0 0.0
    %331 = vmatpush1.msra.mxu0 0.0
    %332 = vmatprep.subr.mxu0 0.0
    %333 = vmatpush1.msra.mxu0 0.0
    %334 = vmatprep.subr.mxu0 0.0
    %335 = vmatpush1.msra.mxu0 0.0
    %336 = vmatprep.subr.mxu0 0.0
    %337 = vmatpush1.msra.mxu0 0.0
    %338 = vmatprep.subr.mxu0 0.0
    %339 = vmatpush1.msra.mxu0 0.0
    %340 = vmatprep.subr.mxu0 0.0
    %341 = vmatpush1.msra.mxu0 0.0
    %342 = vmatprep.subr.mxu0 0.0
    %343 = vmatpush1.msra.mxu0 0.0
    %344 = vmatprep.subr.mxu0 0.0
    %345 = vmatpush1.msra.mxu0 0.0
    %346 = vmatprep.subr.mxu0 0.0
    %347 = vmatpush1.msra.mxu0 %v311
    %348 = vmatprep.subr.mxu0 0.0
    %349 = vmatpush2.msra.mxu0 0.0
    %350 = vmatprep.subr.mxu0 0.0
    %351 = vmatpush2.msra.mxu0 0.0
    %352 = vmatprep.subr.mxu0 0.0
    %353 = vmatpush2.msra.mxu0 0.0
    %354 = vmatprep.subr.mxu0 0.0
    %355 = vmatpush2.msra.mxu0 0.0
    %356 = vmatprep.subr.mxu0 0.0
    %357 = vmatpush2.msra.mxu0 0.0
    %358 = vmatprep.subr.mxu0 0.0
    %359 = vmatpush2.msra.mxu0 0.0
    %360 = vmatprep.subr.mxu0 0.0
    %361 = vmatpush2.msra.mxu0 0.0
    %362 = vmatprep.subr.mxu0 0.0
    %363 = vmatpush2.msra.mxu0 0.0
    %364 = vmatprep.subr.mxu0 0.0
    %365 = vmatpush2.msra.mxu0 0.0
    %366 = vmatprep.subr.mxu0 0.0
    %367 = vmatpush2.msra.mxu0 0.0
    %368 = vmatprep.subr.mxu0 0.0
    %369 = vmatpush2.msra.mxu0 0.0
    %370 = vmatprep.subr.mxu0 0.0
    %371 = vmatpush2.msra.mxu0 0.0
    %372 = vmatprep.subr.mxu0 0.0
    %373 = vmatpush2.msra.mxu0 0.0
    %374 = vmatprep.subr.mxu0 0.0
    %375 = vmatpush2.msra.mxu0 0.0
    %376 = vmatprep.subr.mxu0 0.0
    %377 = vmatpush2.msra.mxu0 0.0
    %378 = vmatprep.subr.mxu0 0.0
    %379 = vmatpush2.msra.mxu0 0.0
    %380 = vmatprep.mubr.f32.mxu0 0.0
    %381 = vmatmul.mubr.f32.gmra.mxu0 %v314
    %v382 = vpop.f32.mrf.mxu0
    %v383 = vadd.f32 0.0, %v382
    %v384 = vpop.f32.mrf.mxu0
    %385 = vdwg.mxu0
    %v387 = vrot.slane %v383, 2
    %v389 = vadd.f32 %v383, %v387
    %v390 = vxor.u32 %v389, 2147483648
    %v391 = vmul.f32 %v390, 1.442695
    %v392 = vpow.pop %v391
    %v393 = vadd.f32 %v392, 1.0
    %v394 = vrcp.pop %v393
    %v395 = vmul.f32 1.0, %v394
    %v396 = vlaneseq
    %v397 = vshrl.u32 %v396, 7
    %v398 = vsub.s32 0, %v397
    %v399 = vrot.slane %v395, %v398
    %401 = vbcast.lane.b32.xlu0 %v399, 256
    %v402 = vpop.permute.xlu0 %401
    %s404 = sor.u32 256, 8
    %405 = vbcast.lane.b32.xlu0 %v399, %s404
    %v406 = vpop.permute.xlu0 %405
    %s408 = sor.u32 256, 16
    %409 = vbcast.lane.b32.xlu0 %v399, %s408
    %v410 = vpop.permute.xlu0 %409
    %s412 = sor.u32 256, 24
    %413 = vbcast.lane.b32.xlu0 %v399, %s412
    %v414 = vpop.permute.xlu0 %413
    %v415 = vlaneseq
    %v416 = vshrl.u32 %v415, 7
    %v417 = vsub.s32 1, %v416
    %v418 = vrot.slane %v395, %v417
    %420 = vbcast.lane.b32.xlu0 %v418, 256
    %v421 = vpop.permute.xlu0 %420
    %s423 = sor.u32 256, 8
    %424 = vbcast.lane.b32.xlu0 %v418, %s423
    %v425 = vpop.permute.xlu0 %424
    %s427 = sor.u32 256, 16
    %428 = vbcast.lane.b32.xlu0 %v418, %s427
    %v429 = vpop.permute.xlu0 %428
    %s431 = sor.u32 256, 24
    %432 = vbcast.lane.b32.xlu0 %v418, %s431
    %v433 = vpop.permute.xlu0 %432
    %v434 = vmul.f32 %v52, %v402
    %v435 = vmul.f32 %v53, %v402
    %v436 = vmul.f32 %v54, %v406
    %v437 = vmul.f32 %v55, %v406
    %v438 = vmul.f32 %v56, %v410
    %v439 = vmul.f32 %v57, %v410
    %v440 = vmul.f32 %v58, %v414
    %v441 = vmul.f32 %v59, %v414
    %v442 = vmul.f32 %v60, %v421
    %v443 = vmul.f32 %v61, %v421
    %v444 = vmul.f32 %v62, %v425
    %v445 = vmul.f32 %v63, %v425
    %v446 = vmul.f32 %v64, %v429
    %v447 = vmul.f32 %v65, %v429
    %v448 = vmul.f32 %v66, %v433
    %v449 = vmul.f32 %v67, %v433
    %v450 = vmax.f32 %v434, %v436
    %v451 = vmax.f32 %v450, %v438
    %v452 = vmax.f32 %v451, %v440
    %v453 = vrot.slane %v452, 4
    %v454 = vmax.f32 %v452, %v453
    %v455 = vrot.slane %v454, 2
    %v456 = vmax.f32 %v454, %v455
    %v457 = vrot.slane %v456, 1
    %v458 = vmax.f32 %v456, %v457
    %v459 = vmax.f32 %v435, %v437
    %v460 = vmax.f32 %v459, %v439
    %v461 = vmax.f32 %v460, %v441
    %v462 = vrot.slane %v461, 4
    %v463 = vmax.f32 %v461, %v462
    %v464 = vrot.slane %v463, 2
    %v465 = vmax.f32 %v463, %v464
    %v466 = vrot.slane %v465, 1
    %v467 = vmax.f32 %v465, %v466
    %v468 = vmax.f32 %v442, %v444
    %v469 = vmax.f32 %v468, %v446
    %v470 = vmax.f32 %v469, %v448
    %v471 = vrot.slane %v470, 4
    %v472 = vmax.f32 %v470, %v471
    %v473 = vrot.slane %v472, 2
    %v474 = vmax.f32 %v472, %v473
    %v475 = vrot.slane %v474, 1
    %v476 = vmax.f32 %v474, %v475
    %v477 = vmax.f32 %v443, %v445
    %v478 = vmax.f32 %v477, %v447
    %v479 = vmax.f32 %v478, %v449
    %v480 = vrot.slane %v479, 4
    %v481 = vmax.f32 %v479, %v480
    %v482 = vrot.slane %v481, 2
    %v483 = vmax.f32 %v481, %v482
    %v484 = vrot.slane %v483, 1
    %v485 = vmax.f32 %v483, %v484
    %v486 = vadd.f32 %v434, %v436
    %v487 = vadd.f32 %v486, %v438
    %v488 = vadd.f32 %v487, %v440
    %v489 = vrot.slane %v488, 4
    %v490 = vadd.f32 %v488, %v489
    %v491 = vrot.slane %v490, 2
    %v492 = vadd.f32 %v490, %v491
    %v493 = vrot.slane %v492, 1
    %v494 = vadd.f32 %v492, %v493
    %v495 = vadd.f32 %v435, %v437
    %v496 = vadd.f32 %v495, %v439
    %v497 = vadd.f32 %v496, %v441
    %v498 = vrot.slane %v497, 4
    %v499 = vadd.f32 %v497, %v498
    %v500 = vrot.slane %v499, 2
    %v501 = vadd.f32 %v499, %v500
    %v502 = vrot.slane %v501, 1
    %v503 = vadd.f32 %v501, %v502
    %v504 = vadd.f32 %v442, %v444
    %v505 = vadd.f32 %v504, %v446
    %v506 = vadd.f32 %v505, %v448
    %v507 = vrot.slane %v506, 4
    %v508 = vadd.f32 %v506, %v507
    %v509 = vrot.slane %v508, 2
    %v510 = vadd.f32 %v508, %v509
    %v511 = vrot.slane %v510, 1
    %v512 = vadd.f32 %v510, %v511
    %v513 = vadd.f32 %v443, %v445
    %v514 = vadd.f32 %v513, %v447
    %v515 = vadd.f32 %v514, %v449
    %v516 = vrot.slane %v515, 4
    %v517 = vadd.f32 %v515, %v516
    %v518 = vrot.slane %v517, 2
    %v519 = vadd.f32 %v517, %v518
    %v520 = vrot.slane %v519, 1
    %v521 = vadd.f32 %v519, %v520
    %v522 = vmul.f32 %v494, 0.03125
    %v523 = vmul.f32 %v503, 0.03125
    %v524 = vmul.f32 %v512, 0.03125
    %v525 = vmul.f32 %v521, 0.03125
    %v526 = vld [vmem:[%s3] sm:$0x7f]
    %v527 = vld [vmem:[%s3 + $0x8] sm:$0x7f]
    %v532 = vsel %vm178, %v476, %v458
    %v533 = vsel %vm178, %v485, %v467
    %534 = vrot.lane.b32.xlu0 %v532, 3
    %v535 = vpop.permute.xlu0 %534
    %536 = vrot.lane.b32.xlu0 %v533, 3
    %v537 = vpop.permute.xlu0 %536
    %vm538 = vcmask 23552
    %v539 = vsel %vm538, %v535, %v537
    %v542 = vsel %vm538, 0.0, %v535
    %v543 = vlaneseq
    %v544 = vshrl.u32 %v543, 7
    %v545 = vsub.s32 0, %v544
    %v546 = vrot.slane %v526, %v545
    %v547 = vlaneseq
    %v548 = vshrl.u32 %v547, 7
    %v549 = vsub.s32 0, %v548
    %v550 = vrot.slane %v527, %v549
    %v551 = vmul.f32 %v542, %v546
    %v552 = vmul.f32 %v539, %v550
    %553 = vrot.lane.b32.xlu0 %v532, 2
    %v554 = vpop.permute.xlu0 %553
    %555 = vrot.lane.b32.xlu0 %v533, 2
    %v556 = vpop.permute.xlu0 %555
    %vm557 = vcmask 15360
    %v558 = vsel %vm557, %v554, %v556
    %v561 = vsel %vm557, 0.0, %v554
    %v562 = vlaneseq
    %v563 = vshrl.u32 %v562, 7
    %v564 = vsub.s32 1, %v563
    %v565 = vrot.slane %v526, %v564
    %v566 = vlaneseq
    %v567 = vshrl.u32 %v566, 7
    %v568 = vsub.s32 1, %v567
    %v569 = vrot.slane %v527, %v568
    %v570 = vmul.f32 %v561, %v565
    %v571 = vmul.f32 %v558, %v569
    %572 = vrot.lane.b32.xlu0 %v532, 1
    %v573 = vpop.permute.xlu0 %572
    %574 = vrot.lane.b32.xlu0 %v533, 1
    %v575 = vpop.permute.xlu0 %574
    %vm576 = vcmask 7168
    %v577 = vsel %vm576, %v573, %v575
    %v580 = vsel %vm576, 0.0, %v573
    %v581 = vlaneseq
    %v582 = vshrl.u32 %v581, 7
    %v583 = vsub.s32 2, %v582
    %v584 = vrot.slane %v526, %v583
    %v585 = vlaneseq
    %v586 = vshrl.u32 %v585, 7
    %v587 = vsub.s32 2, %v586
    %v588 = vrot.slane %v527, %v587
    %v589 = vmul.f32 %v580, %v584
    %v590 = vmul.f32 %v577, %v588
    %591 = vrot.lane.b32.xlu0 %v532, 127
    %v592 = vpop.permute.xlu0 %591
    %593 = vrot.lane.b32.xlu0 %v533, 127
    %v594 = vpop.permute.xlu0 %593
    %vm595 = vcmask 1039360
    %v596 = vsel %vm595, %v592, %v594
    %v599 = vsel %vm595, %v594, 0.0
    %v600 = vlaneseq
    %v601 = vshrl.u32 %v600, 7
    %v602 = vsub.s32 4, %v601
    %v603 = vrot.slane %v526, %v602
    %v604 = vlaneseq
    %v605 = vshrl.u32 %v604, 7
    %v606 = vsub.s32 4, %v605
    %v607 = vrot.slane %v527, %v606
    %v608 = vmul.f32 %v596, %v603
    %v609 = vmul.f32 %v599, %v607
    %610 = vrot.lane.b32.xlu0 %v532, 126
    %v611 = vpop.permute.xlu0 %610
    %612 = vrot.lane.b32.xlu0 %v533, 126
    %v613 = vpop.permute.xlu0 %612
    %vm614 = vcmask 1031168
    %v615 = vsel %vm614, %v611, %v613
    %v618 = vsel %vm614, %v613, 0.0
    %v619 = vlaneseq
    %v620 = vshrl.u32 %v619, 7
    %v621 = vsub.s32 5, %v620
    %v622 = vrot.slane %v526, %v621
    %v623 = vlaneseq
    %v624 = vshrl.u32 %v623, 7
    %v625 = vsub.s32 5, %v624
    %v626 = vrot.slane %v527, %v625
    %v627 = vmul.f32 %v615, %v622
    %v628 = vmul.f32 %v618, %v626
    %629 = vrot.lane.b32.xlu0 %v532, 125
    %v630 = vpop.permute.xlu0 %629
    %631 = vrot.lane.b32.xlu0 %v533, 125
    %v632 = vpop.permute.xlu0 %631
    %vm633 = vcmask 1022976
    %v634 = vsel %vm633, %v630, %v632
    %v637 = vsel %vm633, %v632, 0.0
    %v638 = vlaneseq
    %v639 = vshrl.u32 %v638, 7
    %v640 = vsub.s32 6, %v639
    %v641 = vrot.slane %v526, %v640
    %v642 = vlaneseq
    %v643 = vshrl.u32 %v642, 7
    %v644 = vsub.s32 6, %v643
    %v645 = vrot.slane %v527, %v644
    %v646 = vmul.f32 %v634, %v641
    %v647 = vmul.f32 %v637, %v645
    %v652 = vsel %vm178, %v524, %v522
    %v653 = vsel %vm178, %v525, %v523
    %654 = vrot.lane.b32.xlu0 %v652, 3
    %v655 = vpop.permute.xlu0 %654
    %656 = vrot.lane.b32.xlu0 %v653, 3
    %v657 = vpop.permute.xlu0 %656
    %v658 = vsel %vm538, %v655, %v657
    %v661 = vsel %vm538, 0.0, %v655
    %v662 = vmul.f32 %v661, %v546
    %v663 = vmul.f32 %v658, %v550
    %664 = vrot.lane.b32.xlu0 %v652, 2
    %v665 = vpop.permute.xlu0 %664
    %666 = vrot.lane.b32.xlu0 %v653, 2
    %v667 = vpop.permute.xlu0 %666
    %v668 = vsel %vm557, %v665, %v667
    %v671 = vsel %vm557, 0.0, %v665
    %v672 = vmul.f32 %v671, %v565
    %v673 = vmul.f32 %v668, %v569
    %674 = vrot.lane.b32.xlu0 %v652, 1
    %v675 = vpop.permute.xlu0 %674
    %676 = vrot.lane.b32.xlu0 %v653, 1
    %v677 = vpop.permute.xlu0 %676
    %v678 = vsel %vm576, %v675, %v677
    %v681 = vsel %vm576, 0.0, %v675
    %v682 = vmul.f32 %v681, %v584
    %v683 = vmul.f32 %v678, %v588
    %684 = vrot.lane.b32.xlu0 %v652, 127
    %v685 = vpop.permute.xlu0 %684
    %686 = vrot.lane.b32.xlu0 %v653, 127
    %v687 = vpop.permute.xlu0 %686
    %v688 = vsel %vm595, %v685, %v687
    %v691 = vsel %vm595, %v687, 0.0
    %v692 = vmul.f32 %v688, %v603
    %v693 = vmul.f32 %v691, %v607
    %694 = vrot.lane.b32.xlu0 %v652, 126
    %v695 = vpop.permute.xlu0 %694
    %696 = vrot.lane.b32.xlu0 %v653, 126
    %v697 = vpop.permute.xlu0 %696
    %v698 = vsel %vm614, %v695, %v697
    %v701 = vsel %vm614, %v697, 0.0
    %v702 = vmul.f32 %v698, %v622
    %v703 = vmul.f32 %v701, %v626
    %704 = vrot.lane.b32.xlu0 %v652, 125
    %v705 = vpop.permute.xlu0 %704
    %706 = vrot.lane.b32.xlu0 %v653, 125
    %v707 = vpop.permute.xlu0 %706
    %v708 = vsel %vm633, %v705, %v707
    %v711 = vsel %vm633, %v707, 0.0
    %v712 = vmul.f32 %v708, %v641
    %v713 = vmul.f32 %v711, %v645
    %s714 = sld [smem:[#allocation7]]
    %v715 = vstv %s714
    %v716 = vmul.f32 %v551, %v715
    %v717 = vmul.f32 %v552, %v715
    %s718 = sld [smem:[#allocation7 + $0x1]]
    %v719 = vstv %s718
    %v720 = vmul.f32 %v570, %v719
    %v721 = vmul.f32 %v571, %v719
    %v722 = vadd.f32 %v716, %v720
    %v723 = vadd.f32 %v717, %v721
    %s724 = sld [smem:[#allocation7 + $0x2]]
    %v725 = vstv %s724
    %v726 = vmul.f32 %v589, %v725
    %v727 = vmul.f32 %v590, %v725
    %v728 = vadd.f32 %v722, %v726
    %v729 = vadd.f32 %v723, %v727
    %s730 = sld [smem:[#allocation7 + $0x3]]
    %v731 = vstv %s730
    %v732 = vmul.f32 %v458, %v731
    %v733 = vmul.f32 %v467, %v731
    %v734 = vmul.f32 %v476, %v731
    %v735 = vmul.f32 %v485, %v731
    %v740 = vsel %vm178, %v734, %v732
    %v741 = vsel %vm178, %v735, %v733
    %v744 = vadd.f32 %v728, %v740
    %v745 = vadd.f32 %v729, %v741
    %s746 = sld [smem:[#allocation7 + $0x4]]
    %v747 = vstv %s746
    %v748 = vmul.f32 %v608, %v747
    %v749 = vmul.f32 %v609, %v747
    %v750 = vadd.f32 %v744, %v748
    %v751 = vadd.f32 %v745, %v749
    %s752 = sld [smem:[#allocation7 + $0x5]]
    %v753 = vstv %s752
    %v754 = vmul.f32 %v627, %v753
    %v755 = vmul.f32 %v628, %v753
    %v756 = vadd.f32 %v750, %v754
    %v757 = vadd.f32 %v751, %v755
    %s758 = sld [smem:[#allocation7 + $0x6]]
    %v759 = vstv %s758
    %v760 = vmul.f32 %v646, %v759
    %v761 = vmul.f32 %v647, %v759
    %v762 = vadd.f32 %v756, %v760
    %v763 = vadd.f32 %v757, %v761
    %s764 = sld [smem:[#allocation7 + $0x31]]
    %v765 = vstv %s764
    %v766 = vmul.f32 %v662, %v765
    %v767 = vmul.f32 %v663, %v765
    %s768 = sld [smem:[#allocation7 + $0x32]]
    %v769 = vstv %s768
    %v770 = vmul.f32 %v672, %v769
    %v771 = vmul.f32 %v673, %v769
    %v772 = vadd.f32 %v766, %v770
    %v773 = vadd.f32 %v767, %v771
    %s774 = sld [smem:[#allocation7 + $0x33]]
    %v775 = vstv %s774
    %v776 = vmul.f32 %v682, %v775
    %v777 = vmul.f32 %v683, %v775
    %v778 = vadd.f32 %v772, %v776
    %v779 = vadd.f32 %v773, %v777
    %s780 = sld [smem:[#allocation7 + $0x34]]
    %v781 = vstv %s780
    %v782 = vmul.f32 %v522, %v781
    %v783 = vmul.f32 %v523, %v781
    %v784 = vmul.f32 %v524, %v781
    %v785 = vmul.f32 %v525, %v781
    %v790 = vsel %vm178, %v784, %v782
    %v791 = vsel %vm178, %v785, %v783
    %v794 = vadd.f32 %v778, %v790
    %v795 = vadd.f32 %v779, %v791
    %s796 = sld [smem:[#allocation7 + $0x35]]
    %v797 = vstv %s796
    %v798 = vmul.f32 %v692, %v797
    %v799 = vmul.f32 %v693, %v797
    %v800 = vadd.f32 %v794, %v798
    %v801 = vadd.f32 %v795, %v799
    %s802 = sld [smem:[#allocation7 + $0x36]]
    %v803 = vstv %s802
    %v804 = vmul.f32 %v702, %v803
    %v805 = vmul.f32 %v703, %v803
    %v806 = vadd.f32 %v800, %v804
    %v807 = vadd.f32 %v801, %v805
    %s808 = sld [smem:[#allocation7 + $0x37]]
    %v809 = vstv %s808
    %v810 = vmul.f32 %v712, %v809
    %v811 = vmul.f32 %v713, %v809
    %v812 = vadd.f32 %v806, %v810
    %v813 = vadd.f32 %v807, %v811
    %v814 = vadd.f32 %v762, %v812
    %v815 = vadd.f32 %v763, %v813
    %s816 = sld [smem:[#allocation7 + $0x7]]
    %v817 = vstv %s816
    %v818 = vmul.f32 %v551, %v817
    %v819 = vmul.f32 %v552, %v817
    %s820 = sld [smem:[#allocation7 + $0x8]]
    %v821 = vstv %s820
    %v822 = vmul.f32 %v570, %v821
    %v823 = vmul.f32 %v571, %v821
    %v824 = vadd.f32 %v818, %v822
    %v825 = vadd.f32 %v819, %v823
    %s826 = sld [smem:[#allocation7 + $0x9]]
    %v827 = vstv %s826
    %v828 = vmul.f32 %v589, %v827
    %v829 = vmul.f32 %v590, %v827
    %v830 = vadd.f32 %v824, %v828
    %v831 = vadd.f32 %v825, %v829
    %s832 = sld [smem:[#allocation7 + $0xa]]
    %v833 = vstv %s832
    %v834 = vmul.f32 %v458, %v833
    %v835 = vmul.f32 %v467, %v833
    %v836 = vmul.f32 %v476, %v833
    %v837 = vmul.f32 %v485, %v833
    %v842 = vsel %vm178, %v836, %v834
    %v843 = vsel %vm178, %v837, %v835
    %v846 = vadd.f32 %v830, %v842
    %v847 = vadd.f32 %v831, %v843
    %s848 = sld [smem:[#allocation7 + $0xb]]
    %v849 = vstv %s848
    %v850 = vmul.f32 %v608, %v849
    %v851 = vmul.f32 %v609, %v849
    %v852 = vadd.f32 %v846, %v850
    %v853 = vadd.f32 %v847, %v851
    %s854 = sld [smem:[#allocation7 + $0xc]]
    %v855 = vstv %s854
    %v856 = vmul.f32 %v627, %v855
    %v857 = vmul.f32 %v628, %v855
    %v858 = vadd.f32 %v852, %v856
    %v859 = vadd.f32 %v853, %v857
    %s860 = sld [smem:[#allocation7 + $0xd]]
    %v861 = vstv %s860
    %v862 = vmul.f32 %v646, %v861
    %v863 = vmul.f32 %v647, %v861
    %v864 = vadd.f32 %v858, %v862
    %v865 = vadd.f32 %v859, %v863
    %s866 = sld [smem:[#allocation7 + $0x38]]
    %v867 = vstv %s866
    %v868 = vmul.f32 %v662, %v867
    %v869 = vmul.f32 %v663, %v867
    %s870 = sld [smem:[#allocation7 + $0x39]]
    %v871 = vstv %s870
    %v872 = vmul.f32 %v672, %v871
    %v873 = vmul.f32 %v673, %v871
    %v874 = vadd.f32 %v868, %v872
    %v875 = vadd.f32 %v869, %v873
    %s876 = sld [smem:[#allocation7 + $0x3a]]
    %v877 = vstv %s876
    %v878 = vmul.f32 %v682, %v877
    %v879 = vmul.f32 %v683, %v877
    %v880 = vadd.f32 %v874, %v878
    %v881 = vadd.f32 %v875, %v879
    %s882 = sld [smem:[#allocation7 + $0x3b]]
    %v883 = vstv %s882
    %v884 = vmul.f32 %v522, %v883
    %v885 = vmul.f32 %v523, %v883
    %v886 = vmul.f32 %v524, %v883
    %v887 = vmul.f32 %v525, %v883
    %v892 = vsel %vm178, %v886, %v884
    %v893 = vsel %vm178, %v887, %v885
    %v896 = vadd.f32 %v880, %v892
    %v897 = vadd.f32 %v881, %v893
    %s898 = sld [smem:[#allocation7 + $0x3c]]
    %v899 = vstv %s898
    %v900 = vmul.f32 %v692, %v899
    %v901 = vmul.f32 %v693, %v899
    %v902 = vadd.f32 %v896, %v900
    %v903 = vadd.f32 %v897, %v901
    %s904 = sld [smem:[#allocation7 + $0x3d]]
    %v905 = vstv %s904
    %v906 = vmul.f32 %v702, %v905
    %v907 = vmul.f32 %v703, %v905
    %v908 = vadd.f32 %v902, %v906
    %v909 = vadd.f32 %v903, %v907
    %s910 = sld [smem:[#allocation7 + $0x3e]]
    %v911 = vstv %s910
    %v912 = vmul.f32 %v712, %v911
    %v913 = vmul.f32 %v713, %v911
    %v914 = vadd.f32 %v908, %v912
    %v915 = vadd.f32 %v909, %v913
    %v916 = vadd.f32 %v864, %v914
    %v917 = vadd.f32 %v865, %v915
    %s918 = sld [smem:[#allocation7 + $0xe]]
    %v919 = vstv %s918
    %v920 = vmul.f32 %v551, %v919
    %v921 = vmul.f32 %v552, %v919
    %s922 = sld [smem:[#allocation7 + $0xf]]
    %v923 = vstv %s922
    %v924 = vmul.f32 %v570, %v923
    %v925 = vmul.f32 %v571, %v923
    %v926 = vadd.f32 %v920, %v924
    %v927 = vadd.f32 %v921, %v925
    %s928 = sld [smem:[#allocation7 + $0x10]]
    %v929 = vstv %s928
    %v930 = vmul.f32 %v589, %v929
    %v931 = vmul.f32 %v590, %v929
    %v932 = vadd.f32 %v926, %v930
    %v933 = vadd.f32 %v927, %v931
    %s934 = sld [smem:[#allocation7 + $0x11]]
    %v935 = vstv %s934
    %v936 = vmul.f32 %v458, %v935
    %v937 = vmul.f32 %v467, %v935
    %v938 = vmul.f32 %v476, %v935
    %v939 = vmul.f32 %v485, %v935
    %v944 = vsel %vm178, %v938, %v936
    %v945 = vsel %vm178, %v939, %v937
    %v948 = vadd.f32 %v932, %v944
    %v949 = vadd.f32 %v933, %v945
    %s950 = sld [smem:[#allocation7 + $0x12]]
    %v951 = vstv %s950
    %v952 = vmul.f32 %v608, %v951
    %v953 = vmul.f32 %v609, %v951
    %v954 = vadd.f32 %v948, %v952
    %v955 = vadd.f32 %v949, %v953
    %s956 = sld [smem:[#allocation7 + $0x13]]
    %v957 = vstv %s956
    %v958 = vmul.f32 %v627, %v957
    %v959 = vmul.f32 %v628, %v957
    %v960 = vadd.f32 %v954, %v958
    %v961 = vadd.f32 %v955, %v959
    %s962 = sld [smem:[#allocation7 + $0x14]]
    %v963 = vstv %s962
    %v964 = vmul.f32 %v646, %v963
    %v965 = vmul.f32 %v647, %v963
    %v966 = vadd.f32 %v960, %v964
    %v967 = vadd.f32 %v961, %v965
    %s968 = sld [smem:[#allocation7 + $0x3f]]
    %v969 = vstv %s968
    %v970 = vmul.f32 %v662, %v969
    %v971 = vmul.f32 %v663, %v969
    %s972 = sld [smem:[#allocation7 + $0x40]]
    %v973 = vstv %s972
    %v974 = vmul.f32 %v672, %v973
    %v975 = vmul.f32 %v673, %v973
    %v976 = vadd.f32 %v970, %v974
    %v977 = vadd.f32 %v971, %v975
    %s978 = sld [smem:[#allocation7 + $0x41]]
    %v979 = vstv %s978
    %v980 = vmul.f32 %v682, %v979
    %v981 = vmul.f32 %v683, %v979
    %v982 = vadd.f32 %v976, %v980
    %v983 = vadd.f32 %v977, %v981
    %s984 = sld [smem:[#allocation7 + $0x42]]
    %v985 = vstv %s984
    %v986 = vmul.f32 %v522, %v985
    %v987 = vmul.f32 %v523, %v985
    %v988 = vmul.f32 %v524, %v985
    %v989 = vmul.f32 %v525, %v985
    %v994 = vsel %vm178, %v988, %v986
    %v995 = vsel %vm178, %v989, %v987
    %v998 = vadd.f32 %v982, %v994
    %v999 = vadd.f32 %v983, %v995
    %s1000 = sld [smem:[#allocation7 + $0x43]]
    %v1001 = vstv %s1000
    %v1002 = vmul.f32 %v692, %v1001
    %v1003 = vmul.f32 %v693, %v1001
    %v1004 = vadd.f32 %v998, %v1002
    %v1005 = vadd.f32 %v999, %v1003
    %s1006 = sld [smem:[#allocation7 + $0x44]]
    %v1007 = vstv %s1006
    %v1008 = vmul.f32 %v702, %v1007
    %v1009 = vmul.f32 %v703, %v1007
    %v1010 = vadd.f32 %v1004, %v1008
    %v1011 = vadd.f32 %v1005, %v1009
    %s1012 = sld [smem:[#allocation7 + $0x45]]
    %v1013 = vstv %s1012
    %v1014 = vmul.f32 %v712, %v1013
    %v1015 = vmul.f32 %v713, %v1013
    %v1016 = vadd.f32 %v1010, %v1014
    %v1017 = vadd.f32 %v1011, %v1015
    %v1018 = vadd.f32 %v966, %v1016
    %v1019 = vadd.f32 %v967, %v1017
    %s1020 = sld [smem:[#allocation7 + $0x15]]
    %v1021 = vstv %s1020
    %v1022 = vmul.f32 %v551, %v1021
    %v1023 = vmul.f32 %v552, %v1021
    %s1024 = sld [smem:[#allocation7 + $0x16]]
    %v1025 = vstv %s1024
    %v1026 = vmul.f32 %v570, %v1025
    %v1027 = vmul.f32 %v571, %v1025
    %v1028 = vadd.f32 %v1022, %v1026
    %v1029 = vadd.f32 %v1023, %v1027
    %s1030 = sld [smem:[#allocation7 + $0x17]]
    %v1031 = vstv %s1030
    %v1032 = vmul.f32 %v589, %v1031
    %v1033 = vmul.f32 %v590, %v1031
    %v1034 = vadd.f32 %v1028, %v1032
    %v1035 = vadd.f32 %v1029, %v1033
    %s1036 = sld [smem:[#allocation7 + $0x18]]
    %v1037 = vstv %s1036
    %v1038 = vmul.f32 %v458, %v1037
    %v1039 = vmul.f32 %v467, %v1037
    %v1040 = vmul.f32 %v476, %v1037
    %v1041 = vmul.f32 %v485, %v1037
    %v1046 = vsel %vm178, %v1040, %v1038
    %v1047 = vsel %vm178, %v1041, %v1039
    %v1050 = vadd.f32 %v1034, %v1046
    %v1051 = vadd.f32 %v1035, %v1047
    %s1052 = sld [smem:[#allocation7 + $0x19]]
    %v1053 = vstv %s1052
    %v1054 = vmul.f32 %v608, %v1053
    %v1055 = vmul.f32 %v609, %v1053
    %v1056 = vadd.f32 %v1050, %v1054
    %v1057 = vadd.f32 %v1051, %v1055
    %s1058 = sld [smem:[#allocation7 + $0x1a]]
    %v1059 = vstv %s1058
    %v1060 = vmul.f32 %v627, %v1059
    %v1061 = vmul.f32 %v628, %v1059
    %v1062 = vadd.f32 %v1056, %v1060
    %v1063 = vadd.f32 %v1057, %v1061
    %s1064 = sld [smem:[#allocation7 + $0x1b]]
    %v1065 = vstv %s1064
    %v1066 = vmul.f32 %v646, %v1065
    %v1067 = vmul.f32 %v647, %v1065
    %v1068 = vadd.f32 %v1062, %v1066
    %v1069 = vadd.f32 %v1063, %v1067
    %s1070 = sld [smem:[#allocation7 + $0x46]]
    %v1071 = vstv %s1070
    %v1072 = vmul.f32 %v662, %v1071
    %v1073 = vmul.f32 %v663, %v1071
    %s1074 = sld [smem:[#allocation7 + $0x47]]
    %v1075 = vstv %s1074
    %v1076 = vmul.f32 %v672, %v1075
    %v1077 = vmul.f32 %v673, %v1075
    %v1078 = vadd.f32 %v1072, %v1076
    %v1079 = vadd.f32 %v1073, %v1077
    %s1080 = sld [smem:[#allocation7 + $0x48]]
    %v1081 = vstv %s1080
    %v1082 = vmul.f32 %v682, %v1081
    %v1083 = vmul.f32 %v683, %v1081
    %v1084 = vadd.f32 %v1078, %v1082
    %v1085 = vadd.f32 %v1079, %v1083
    %s1086 = sld [smem:[#allocation7 + $0x49]]
    %v1087 = vstv %s1086
    %v1088 = vmul.f32 %v522, %v1087
    %v1089 = vmul.f32 %v523, %v1087
    %v1090 = vmul.f32 %v524, %v1087
    %v1091 = vmul.f32 %v525, %v1087
    %v1096 = vsel %vm178, %v1090, %v1088
    %v1097 = vsel %vm178, %v1091, %v1089
    %v1100 = vadd.f32 %v1084, %v1096
    %v1101 = vadd.f32 %v1085, %v1097
    %s1102 = sld [smem:[#allocation7 + $0x4a]]
    %v1103 = vstv %s1102
    %v1104 = vmul.f32 %v692, %v1103
    %v1105 = vmul.f32 %v693, %v1103
    %v1106 = vadd.f32 %v1100, %v1104
    %v1107 = vadd.f32 %v1101, %v1105
    %s1108 = sld [smem:[#allocation7 + $0x4b]]
    %v1109 = vstv %s1108
    %v1110 = vmul.f32 %v702, %v1109
    %v1111 = vmul.f32 %v703, %v1109
    %v1112 = vadd.f32 %v1106, %v1110
    %v1113 = vadd.f32 %v1107, %v1111
    %s1114 = sld [smem:[#allocation7 + $0x4c]]
    %v1115 = vstv %s1114
    %v1116 = vmul.f32 %v712, %v1115
    %v1117 = vmul.f32 %v713, %v1115
    %v1118 = vadd.f32 %v1112, %v1116
    %v1119 = vadd.f32 %v1113, %v1117
    %v1120 = vadd.f32 %v1068, %v1118
    %v1121 = vadd.f32 %v1069, %v1119
    %s1122 = sld [smem:[#allocation7 + $0x1c]]
    %v1123 = vstv %s1122
    %v1124 = vmul.f32 %v551, %v1123
    %v1125 = vmul.f32 %v552, %v1123
    %s1126 = sld [smem:[#allocation7 + $0x1d]]
    %v1127 = vstv %s1126
    %v1128 = vmul.f32 %v570, %v1127
    %v1129 = vmul.f32 %v571, %v1127
    %v1130 = vadd.f32 %v1124, %v1128
    %v1131 = vadd.f32 %v1125, %v1129
    %s1132 = sld [smem:[#allocation7 + $0x1e]]
    %v1133 = vstv %s1132
    %v1134 = vmul.f32 %v589, %v1133
    %v1135 = vmul.f32 %v590, %v1133
    %v1136 = vadd.f32 %v1130, %v1134
    %v1137 = vadd.f32 %v1131, %v1135
    %s1138 = sld [smem:[#allocation7 + $0x1f]]
    %v1139 = vstv %s1138
    %v1140 = vmul.f32 %v458, %v1139
    %v1141 = vmul.f32 %v467, %v1139
    %v1142 = vmul.f32 %v476, %v1139
    %v1143 = vmul.f32 %v485, %v1139
    %v1148 = vsel %vm178, %v1142, %v1140
    %v1149 = vsel %vm178, %v1143, %v1141
    %v1152 = vadd.f32 %v1136, %v1148
    %v1153 = vadd.f32 %v1137, %v1149
    %s1154 = sld [smem:[#allocation7 + $0x20]]
    %v1155 = vstv %s1154
    %v1156 = vmul.f32 %v608, %v1155
    %v1157 = vmul.f32 %v609, %v1155
    %v1158 = vadd.f32 %v1152, %v1156
    %v1159 = vadd.f32 %v1153, %v1157
    %s1160 = sld [smem:[#allocation7 + $0x21]]
    %v1161 = vstv %s1160
    %v1162 = vmul.f32 %v627, %v1161
    %v1163 = vmul.f32 %v628, %v1161
    %v1164 = vadd.f32 %v1158, %v1162
    %v1165 = vadd.f32 %v1159, %v1163
    %s1166 = sld [smem:[#allocation7 + $0x22]]
    %v1167 = vstv %s1166
    %v1168 = vmul.f32 %v646, %v1167
    %v1169 = vmul.f32 %v647, %v1167
    %v1170 = vadd.f32 %v1164, %v1168
    %v1171 = vadd.f32 %v1165, %v1169
    %s1172 = sld [smem:[#allocation7 + $0x4d]]
    %v1173 = vstv %s1172
    %v1174 = vmul.f32 %v662, %v1173
    %v1175 = vmul.f32 %v663, %v1173
    %s1176 = sld [smem:[#allocation7 + $0x4e]]
    %v1177 = vstv %s1176
    %v1178 = vmul.f32 %v672, %v1177
    %v1179 = vmul.f32 %v673, %v1177
    %v1180 = vadd.f32 %v1174, %v1178
    %v1181 = vadd.f32 %v1175, %v1179
    %s1182 = sld [smem:[#allocation7 + $0x4f]]
    %v1183 = vstv %s1182
    %v1184 = vmul.f32 %v682, %v1183
    %v1185 = vmul.f32 %v683, %v1183
    %v1186 = vadd.f32 %v1180, %v1184
    %v1187 = vadd.f32 %v1181, %v1185
    %s1188 = sld [smem:[#allocation7 + $0x50]]
    %v1189 = vstv %s1188
    %v1190 = vmul.f32 %v522, %v1189
    %v1191 = vmul.f32 %v523, %v1189
    %v1192 = vmul.f32 %v524, %v1189
    %v1193 = vmul.f32 %v525, %v1189
    %v1198 = vsel %vm178, %v1192, %v1190
    %v1199 = vsel %vm178, %v1193, %v1191
    %v1202 = vadd.f32 %v1186, %v1198
    %v1203 = vadd.f32 %v1187, %v1199
    %s1204 = sld [smem:[#allocation7 + $0x51]]
    %v1205 = vstv %s1204
    %v1206 = vmul.f32 %v692, %v1205
    %v1207 = vmul.f32 %v693, %v1205
    %v1208 = vadd.f32 %v1202, %v1206
    %v1209 = vadd.f32 %v1203, %v1207
    %s1210 = sld [smem:[#allocation7 + $0x52]]
    %v1211 = vstv %s1210
    %v1212 = vmul.f32 %v702, %v1211
    %v1213 = vmul.f32 %v703, %v1211
    %v1214 = vadd.f32 %v1208, %v1212
    %v1215 = vadd.f32 %v1209, %v1213
    %s1216 = sld [smem:[#allocation7 + $0x53]]
    %v1217 = vstv %s1216
    %v1218 = vmul.f32 %v712, %v1217
    %v1219 = vmul.f32 %v713, %v1217
    %v1220 = vadd.f32 %v1214, %v1218
    %v1221 = vadd.f32 %v1215, %v1219
    %v1222 = vadd.f32 %v1170, %v1220
    %v1223 = vadd.f32 %v1171, %v1221
    %s1224 = sld [smem:[#allocation7 + $0x23]]
    %v1225 = vstv %s1224
    %v1226 = vmul.f32 %v551, %v1225
    %v1227 = vmul.f32 %v552, %v1225
    %s1228 = sld [smem:[#allocation7 + $0x24]]
    %v1229 = vstv %s1228
    %v1230 = vmul.f32 %v570, %v1229
    %v1231 = vmul.f32 %v571, %v1229
    %v1232 = vadd.f32 %v1226, %v1230
    %v1233 = vadd.f32 %v1227, %v1231
    %s1234 = sld [smem:[#allocation7 + $0x25]]
    %v1235 = vstv %s1234
    %v1236 = vmul.f32 %v589, %v1235
    %v1237 = vmul.f32 %v590, %v1235
    %v1238 = vadd.f32 %v1232, %v1236
    %v1239 = vadd.f32 %v1233, %v1237
    %s1240 = sld [smem:[#allocation7 + $0x26]]
    %v1241 = vstv %s1240
    %v1242 = vmul.f32 %v458, %v1241
    %v1243 = vmul.f32 %v467, %v1241
    %v1244 = vmul.f32 %v476, %v1241
    %v1245 = vmul.f32 %v485, %v1241
    %v1250 = vsel %vm178, %v1244, %v1242
    %v1251 = vsel %vm178, %v1245, %v1243
    %v1254 = vadd.f32 %v1238, %v1250
    %v1255 = vadd.f32 %v1239, %v1251
    %s1256 = sld [smem:[#allocation7 + $0x27]]
    %v1257 = vstv %s1256
    %v1258 = vmul.f32 %v608, %v1257
    %v1259 = vmul.f32 %v609, %v1257
    %v1260 = vadd.f32 %v1254, %v1258
    %v1261 = vadd.f32 %v1255, %v1259
    %s1262 = sld [smem:[#allocation7 + $0x28]]
    %v1263 = vstv %s1262
    %v1264 = vmul.f32 %v627, %v1263
    %v1265 = vmul.f32 %v628, %v1263
    %v1266 = vadd.f32 %v1260, %v1264
    %v1267 = vadd.f32 %v1261, %v1265
    %s1268 = sld [smem:[#allocation7 + $0x29]]
    %v1269 = vstv %s1268
    %v1270 = vmul.f32 %v646, %v1269
    %v1271 = vmul.f32 %v647, %v1269
    %v1272 = vadd.f32 %v1266, %v1270
    %v1273 = vadd.f32 %v1267, %v1271
    %s1274 = sld [smem:[#allocation7 + $0x54]]
    %v1275 = vstv %s1274
    %v1276 = vmul.f32 %v662, %v1275
    %v1277 = vmul.f32 %v663, %v1275
    %s1278 = sld [smem:[#allocation7 + $0x55]]
    %v1279 = vstv %s1278
    %v1280 = vmul.f32 %v672, %v1279
    %v1281 = vmul.f32 %v673, %v1279
    %v1282 = vadd.f32 %v1276, %v1280
    %v1283 = vadd.f32 %v1277, %v1281
    %s1284 = sld [smem:[#allocation7 + $0x56]]
    %v1285 = vstv %s1284
    %v1286 = vmul.f32 %v682, %v1285
    %v1287 = vmul.f32 %v683, %v1285
    %v1288 = vadd.f32 %v1282, %v1286
    %v1289 = vadd.f32 %v1283, %v1287
    %s1290 = sld [smem:[#allocation7 + $0x57]]
    %v1291 = vstv %s1290
    %v1292 = vmul.f32 %v522, %v1291
    %v1293 = vmul.f32 %v523, %v1291
    %v1294 = vmul.f32 %v524, %v1291
    %v1295 = vmul.f32 %v525, %v1291
    %v1300 = vsel %vm178, %v1294, %v1292
    %v1301 = vsel %vm178, %v1295, %v1293
    %v1304 = vadd.f32 %v1288, %v1300
    %v1305 = vadd.f32 %v1289, %v1301
    %s1306 = sld [smem:[#allocation7 + $0x58]]
    %v1307 = vstv %s1306
    %v1308 = vmul.f32 %v692, %v1307
    %v1309 = vmul.f32 %v693, %v1307
    %v1310 = vadd.f32 %v1304, %v1308
    %v1311 = vadd.f32 %v1305, %v1309
    %s1312 = sld [smem:[#allocation7 + $0x59]]
    %v1313 = vstv %s1312
    %v1314 = vmul.f32 %v702, %v1313
    %v1315 = vmul.f32 %v703, %v1313
    %v1316 = vadd.f32 %v1310, %v1314
    %v1317 = vadd.f32 %v1311, %v1315
    %s1318 = sld [smem:[#allocation7 + $0x5a]]
    %v1319 = vstv %s1318
    %v1320 = vmul.f32 %v712, %v1319
    %v1321 = vmul.f32 %v713, %v1319
    %v1322 = vadd.f32 %v1316, %v1320
    %v1323 = vadd.f32 %v1317, %v1321
    %v1324 = vadd.f32 %v1272, %v1322
    %v1325 = vadd.f32 %v1273, %v1323
    %s1326 = sld [smem:[#allocation7 + $0x2a]]
    %v1327 = vstv %s1326
    %v1328 = vmul.f32 %v551, %v1327
    %v1329 = vmul.f32 %v552, %v1327
    %s1330 = sld [smem:[#allocation7 + $0x2b]]
    %v1331 = vstv %s1330
    %v1332 = vmul.f32 %v570, %v1331
    %v1333 = vmul.f32 %v571, %v1331
    %v1334 = vadd.f32 %v1328, %v1332
    %v1335 = vadd.f32 %v1329, %v1333
    %s1336 = sld [smem:[#allocation7 + $0x2c]]
    %v1337 = vstv %s1336
    %v1338 = vmul.f32 %v589, %v1337
    %v1339 = vmul.f32 %v590, %v1337
    %v1340 = vadd.f32 %v1334, %v1338
    %v1341 = vadd.f32 %v1335, %v1339
    %s1342 = sld [smem:[#allocation7 + $0x2d]]
    %v1343 = vstv %s1342
    %v1344 = vmul.f32 %v458, %v1343
    %v1345 = vmul.f32 %v467, %v1343
    %v1346 = vmul.f32 %v476, %v1343
    %v1347 = vmul.f32 %v485, %v1343
    %v1352 = vsel %vm178, %v1346, %v1344
    %v1353 = vsel %vm178, %v1347, %v1345
    %v1356 = vadd.f32 %v1340, %v1352
    %v1357 = vadd.f32 %v1341, %v1353
    %s1358 = sld [smem:[#allocation7 + $0x2e]]
    %v1359 = vstv %s1358
    %v1360 = vmul.f32 %v608, %v1359
    %v1361 = vmul.f32 %v609, %v1359
    %v1362 = vadd.f32 %v1356, %v1360
    %v1363 = vadd.f32 %v1357, %v1361
    %s1364 = sld [smem:[#allocation7 + $0x2f]]
    %v1365 = vstv %s1364
    %v1366 = vmul.f32 %v627, %v1365
    %v1367 = vmul.f32 %v628, %v1365
    %v1368 = vadd.f32 %v1362, %v1366
    %v1369 = vadd.f32 %v1363, %v1367
    %s1370 = sld [smem:[#allocation7 + $0x30]]
    %v1371 = vstv %s1370
    %v1372 = vmul.f32 %v646, %v1371
    %v1373 = vmul.f32 %v647, %v1371
    %v1374 = vadd.f32 %v1368, %v1372
    %v1375 = vadd.f32 %v1369, %v1373
    %s1376 = sld [smem:[#allocation7 + $0x5b]]
    %v1377 = vstv %s1376
    %v1378 = vmul.f32 %v662, %v1377
    %v1379 = vmul.f32 %v663, %v1377
    %s1380 = sld [smem:[#allocation7 + $0x5c]]
    %v1381 = vstv %s1380
    %v1382 = vmul.f32 %v672, %v1381
    %v1383 = vmul.f32 %v673, %v1381
    %v1384 = vadd.f32 %v1378, %v1382
    %v1385 = vadd.f32 %v1379, %v1383
    %s1386 = sld [smem:[#allocation7 + $0x5d]]
    %v1387 = vstv %s1386
    %v1388 = vmul.f32 %v682, %v1387
    %v1389 = vmul.f32 %v683, %v1387
    %v1390 = vadd.f32 %v1384, %v1388
    %v1391 = vadd.f32 %v1385, %v1389
    %s1392 = sld [smem:[#allocation7 + $0x5e]]
    %v1393 = vstv %s1392
    %v1394 = vmul.f32 %v522, %v1393
    %v1395 = vmul.f32 %v523, %v1393
    %v1396 = vmul.f32 %v524, %v1393
    %v1397 = vmul.f32 %v525, %v1393
    %v1402 = vsel %vm178, %v1396, %v1394
    %v1403 = vsel %vm178, %v1397, %v1395
    %v1406 = vadd.f32 %v1390, %v1402
    %v1407 = vadd.f32 %v1391, %v1403
    %s1408 = sld [smem:[#allocation7 + $0x5f]]
    %v1409 = vstv %s1408
    %v1410 = vmul.f32 %v692, %v1409
    %v1411 = vmul.f32 %v693, %v1409
    %v1412 = vadd.f32 %v1406, %v1410
    %v1413 = vadd.f32 %v1407, %v1411
    %s1414 = sld [smem:[#allocation7 + $0x60]]
    %v1415 = vstv %s1414
    %v1416 = vmul.f32 %v702, %v1415
    %v1417 = vmul.f32 %v703, %v1415
    %v1418 = vadd.f32 %v1412, %v1416
    %v1419 = vadd.f32 %v1413, %v1417
    %s1420 = sld [smem:[#allocation7 + $0x61]]
    %v1421 = vstv %s1420
    %v1422 = vmul.f32 %v712, %v1421
    %v1423 = vmul.f32 %v713, %v1421
    %v1424 = vadd.f32 %v1418, %v1422
    %v1425 = vadd.f32 %v1419, %v1423
    %v1426 = vadd.f32 %v1374, %v1424
    %v1427 = vadd.f32 %v1375, %v1425
    %s1428 = sld [smem:[#allocation2]]
    %v1429 = vstv %s1428
    %1432 = vrot.lane.b32.xlu0 %v814, 48
    %v1433 = vpop.permute.xlu0 %1432
    %1434 = vrot.lane.b32.xlu0 %v815, 48
    %v1435 = vpop.permute.xlu0 %1434
    %vm1436 = vcmask 392192
    %v1437 = vsel %vm1436, %v1433, %v1435
    %v1440 = vsel %vm1436, 0.0, %v1433
    %v1441 = vadd.f32 %v1429, %v1440
    %v1442 = vadd.f32 %v1429, %v1437
    %1445 = vrot.lane.b32.xlu0 %v916, 32
    %v1446 = vpop.permute.xlu0 %1445
    %1447 = vrot.lane.b32.xlu0 %v917, 32
    %v1448 = vpop.permute.xlu0 %1447
    %v1449 = vsel %vm236, %v1446, %v1448
    %v1452 = vsel %vm236, 0.0, %v1446
    %v1453 = vadd.f32 %v1441, %v1452
    %v1454 = vadd.f32 %v1442, %v1449
    %1457 = vrot.lane.b32.xlu0 %v1018, 16
    %v1458 = vpop.permute.xlu0 %1457
    %1459 = vrot.lane.b32.xlu0 %v1019, 16
    %v1460 = vpop.permute.xlu0 %1459
    %vm1461 = vcmask 130048
    %v1462 = vsel %vm1461, %v1458, %v1460
    %v1465 = vsel %vm1461, 0.0, %v1458
    %v1466 = vadd.f32 %v1453, %v1465
    %v1467 = vadd.f32 %v1454, %v1462
    %v1468 = vadd.f32 %v1466, %v1120
    %v1469 = vadd.f32 %v1467, %v1121
    %1472 = vrot.lane.b32.xlu0 %v1222, 112
    %v1473 = vpop.permute.xlu0 %1472
    %1474 = vrot.lane.b32.xlu0 %v1223, 112
    %v1475 = vpop.permute.xlu0 %1474
    %vm1476 = vcmask 916480
    %v1477 = vsel %vm1476, %v1473, %v1475
    %v1480 = vsel %vm1476, %v1475, 0.0
    %v1481 = vadd.f32 %v1468, %v1477
    %v1482 = vadd.f32 %v1469, %v1480
    %1485 = vrot.lane.b32.xlu0 %v1324, 96
    %v1486 = vpop.permute.xlu0 %1485
    %1487 = vrot.lane.b32.xlu0 %v1325, 96
    %v1488 = vpop.permute.xlu0 %1487
    %vm1489 = vcmask 785408
    %v1490 = vsel %vm1489, %v1486, %v1488
    %v1493 = vsel %vm1489, %v1488, 0.0
    %v1494 = vadd.f32 %v1481, %v1490
    %v1495 = vadd.f32 %v1482, %v1493
    %1498 = vrot.lane.b32.xlu0 %v1426, 80
    %v1499 = vpop.permute.xlu0 %1498
    %1500 = vrot.lane.b32.xlu0 %v1427, 80
    %v1501 = vpop.permute.xlu0 %1500
    %vm1502 = vcmask 654336
    %v1503 = vsel %vm1502, %v1499, %v1501
    %v1506 = vsel %vm1502, %v1501, 0.0
    %v1507 = vadd.f32 %v1494, %v1503
    %v1508 = vadd.f32 %v1495, %v1506
    %v1509 = vxor.u32 %v1507, 2147483648
    %v1510 = vxor.u32 %v1508, 2147483648
    %v1511 = vmul.f32 %v1509, 1.442695
    %v1512 = vpow.pop %v1511
    %v1513 = vmul.f32 %v1510, 1.442695
    %v1514 = vpow.pop %v1513
    %v1515 = vadd.f32 %v1512, 1.0
    %v1516 = vadd.f32 %v1514, 1.0
    %v1517 = vrcp.pop %v1515
    %v1518 = vmul.f32 1.0, %v1517
    %v1519 = vrcp.pop %v1516
    %v1520 = vmul.f32 1.0, %v1519
    %v1523 = vcombine.low %v1518, %v1520
    %v1525 = vunpack.c.l.s4 1966171168
    %v1526 = vunpack.c.0.s8 %v1525
    %v1527 = vlaneseq
    %v1528 = vshrl.u32 %v1527, 7
    %v1529 = vsub.s32 %v1526, %v1528
    %v1530 = vrot.slane %v1523, %v1529
    %v1531 = vcombine.high %v1530, %v1530
    %v1533 = vunpack.c.l.s4 1966171168
    %v1534 = vunpack.c.0.s8 %v1533
    %v1535 = vlaneseq
    %v1536 = vshrl.u32 %v1535, 7
    %v1537 = vsub.s32 %v1534, %v1536
    %v1538 = vrot.slane %v1530, %v1537
    %v1540 = vunpack.c.l.s4 1966171168
    %v1541 = vunpack.c.0.s8 %v1540
    %v1542 = vlaneseq
    %v1543 = vshrl.u32 %v1542, 7
    %v1544 = vsub.s32 %v1541, %v1543
    %v1545 = vrot.slane %v1531, %v1544
    %v1546 = vlaneseq
    %v1547 = vshrl.u32 %v1546, 7
    %v1548 = vsub.s32 0, %v1547
    %v1549 = vrot.slane %v1538, %v1548
    %v1550 = vlaneseq
    %v1551 = vshrl.u32 %v1550, 7
    %v1552 = vsub.s32 1, %v1551
    %v1553 = vrot.slane %v1538, %v1552
    %v1554 = vlaneseq
    %v1555 = vshrl.u32 %v1554, 7
    %v1556 = vsub.s32 0, %v1555
    %v1557 = vrot.slane %v1545, %v1556
    %v1558 = vlaneseq
    %v1559 = vshrl.u32 %v1558, 7
    %v1560 = vsub.s32 1, %v1559
    %v1561 = vrot.slane %v1545, %v1560
    %v1566 = vmul.f32 %v434, %v1549
    %v1567 = vmul.f32 %v435, %v1553
    %v1568 = vmul.f32 %v436, %v1549
    %v1569 = vmul.f32 %v437, %v1553
    %v1570 = vmul.f32 %v438, %v1549
    %v1571 = vmul.f32 %v439, %v1553
    %v1572 = vmul.f32 %v440, %v1549
    %v1573 = vmul.f32 %v441, %v1553
    %v1574 = vmul.f32 %v442, %v1557
    %v1575 = vmul.f32 %v443, %v1561
    %v1576 = vmul.f32 %v444, %v1557
    %v1577 = vmul.f32 %v445, %v1561
    %v1578 = vmul.f32 %v446, %v1557
    %v1579 = vmul.f32 %v447, %v1561
    %v1580 = vmul.f32 %v448, %v1557
    %v1581 = vmul.f32 %v449, %v1561
    %v1582 = vadd.f32 %v1566, %v52
    %v1583 = vadd.f32 %v1567, %v53
    %v1584 = vadd.f32 %v1568, %v54
    %v1585 = vadd.f32 %v1569, %v55
    %v1586 = vadd.f32 %v1570, %v56
    %v1587 = vadd.f32 %v1571, %v57
    %v1588 = vadd.f32 %v1572, %v58
    %v1589 = vadd.f32 %v1573, %v59
    %v1590 = vadd.f32 %v1574, %v60
    %v1591 = vadd.f32 %v1575, %v61
    %v1592 = vadd.f32 %v1576, %v62
    %v1593 = vadd.f32 %v1577, %v63
    %v1594 = vadd.f32 %v1578, %v64
    %v1595 = vadd.f32 %v1579, %v65
    %v1596 = vadd.f32 %v1580, %v66
    %v1597 = vadd.f32 %v1581, %v67
    %1598 = vst [vmem:[#allocation8] sm:$0xff] %v1582
    %1599 = vst [vmem:[#allocation8 + $0x8] sm:$0xff] %v1583
    %1600 = vst [vmem:[#allocation8 + $0x10] sm:$0xff] %v1584
    %1601 = vst [vmem:[#allocation8 + $0x18] sm:$0xff] %v1585
    %1602 = vst [vmem:[#allocation8 + $0x20] sm:$0xff] %v1586
    %1603 = vst [vmem:[#allocation8 + $0x28] sm:$0xff] %v1587
    %1604 = vst [vmem:[#allocation8 + $0x30] sm:$0xff] %v1588
    %1605 = vst [vmem:[#allocation8 + $0x38] sm:$0xff] %v1589
    %1606 = vst [vmem:[#allocation8 + $0x40] sm:$0xff] %v1590
    %1607 = vst [vmem:[#allocation8 + $0x48] sm:$0xff] %v1591
    %1608 = vst [vmem:[#allocation8 + $0x50] sm:$0xff] %v1592
    %1609 = vst [vmem:[#allocation8 + $0x58] sm:$0xff] %v1593
    %1610 = vst [vmem:[#allocation8 + $0x60] sm:$0xff] %v1594
    %1611 = vst [vmem:[#allocation8 + $0x68] sm:$0xff] %v1595
    %1612 = vst [vmem:[#allocation8 + $0x70] sm:$0xff] %v1596
    %1613 = vst [vmem:[#allocation8 + $0x78] sm:$0xff] %v1597
    // Predicated region
    $region34: #{tpu_custom_call.1} parent=1 // pred_check
      _
    $region35: #{tpu_custom_call.1} parent=1 // pred_check_branch
      %1615 = sbr.rel (0) target = $region37
    $region36: #{tpu_custom_call.1} parent=1 // pred_region
      %s1617 = ssub.s32 2048, 2048
      %1618 = vsyncadd [#allocation5], %s1617
      %s1619 = sshll.u32 [#allocation8], 4
      %s1620 = int_to_ptr.vmem [resolvable:$true] %s1619
      %1625 = dma.vmem_to_hbm [thread:$0]  %s1620, 2048, %s6, [#allocation5], 256, 256, 16
    $region37: #{tpu_custom_call.1} parent=1 // pred_fallthru
      _
    // Predicated region
    $region38: #{tpu_custom_call.1} parent=1 // pred_check
      _
    $region39: #{tpu_custom_call.1} parent=1 // pred_check_branch
      %1627 = sbr.rel (0) target = $region41
    $region40: #{tpu_custom_call.1} parent=1 // pred_region
      %1628 = dma.done [#allocation5], 2048
    $region41: #{tpu_custom_call.1} parent=1 // pred_fallthru
      _
    %1629 = vsyncpa [#allocation4], 1
    %1630 = vsyncpa [#allocation5], 1
    %1631 = vsyncpa [#allocation6], 1

</llo_original>
